<compile_context>
chip_gen: v5e
topology: v5e:2x2
jax: 0.10.0
libtpu: 0.0.40
codegen_flags: <defaults>
</compile_context>

<pallas_src>
import functools
import math

import numpy as np

import jax
import jax.numpy as jnp
from jax.experimental import pallas as pl
from jax.experimental.pallas import tpu as pltpu


# ---------------------------------------------------------------------------
# Host-side constant builders (folded into kernel inputs)
# ---------------------------------------------------------------------------
def _adaptive_pool_matrix(in_size, out_size):
    """Averaging weights of torch AdaptiveAvgPool1d(out_size); shape (out_size, in_size)."""
    i = np.arange(out_size)
    start = (i * in_size) // out_size                 # floor(i * in / out)
    end = -((-(i + 1) * in_size) // out_size)         # ceil((i+1) * in / out)
    idx = np.arange(in_size)
    member = (idx[None, :] >= start[:, None]) & (idx[None, :] < end[:, None])
    return member.astype(np.float32) / (end - start)[:, None].astype(np.float32)


def _band_matrix(w, C, wrap):
    """Banded conv matrix: M[c, c'] = w[(c' - c + wrap) + pad] when the tap exists, else 0."""
    k = int(w.shape[0])
    pad = (k - 1) // 2
    ci = jnp.arange(C)
    d = ci[None, :] - ci[:, None] + wrap              # effective conv offset
    t = d + pad                                       # tap index
    valid = (t >= 0) & (t < k)
    return jnp.where(valid, w.astype(jnp.float32)[jnp.clip(t, 0, k - 1)], 0.0)


# ---------------------------------------------------------------------------
# Kernel
# ---------------------------------------------------------------------------
def _mlca_kernel(pool_ref, up_ref, mg_ref, ml_ref, snxt_ref, sprv_ref,
                 x_ref, o_ref, *, local_weight):
    f32 = jnp.float32
    bf16 = jnp.bfloat16

    xb = x_ref[...]                                   # (Bt, C, HW) in the input dtype
    bt, c, hw = xb.shape
    bc = bt * c
    x2 = xb.reshape(bc, hw)                           # collapse major dims (free)

    # (1) AdaptiveAvgPool2d(L) as one lane-dense bf16 MXU matmul, f32 accumulation.
    pooled = jnp.dot(x2.astype(bf16), pool_ref[...],
                     preferred_element_type=f32)      # (BC, L2) f32

    # (2) global branch: mean over the L*L cells first (XLU lane reduce), then one tiny
    #     banded channel-conv matmul (1/L^2 already folded into mg host-side).
    gsum = jnp.sum(pooled, axis=1, keepdims=True)     # (BC, 1)
    att_g = jax.nn.sigmoid(jnp.dot(mg_ref[...], gsum,
                                   preferred_element_type=f32))     # (BC, 1)

    # (3) local branch: Conv1d over the (position, channel)-interleaved sequence.
    #     Single fused matmul for the three channel-tap groups (same / next / previous
    #     spatial position); the position wrap is two exact (L2,L2) shift matmuls that
    #     also zero the taps running off the sequence ends.
    tloc = jnp.dot(ml_ref[...], pooled, preferred_element_type=f32)  # (3*BC, L2)
    y_l = (tloc[:bc]
           + jnp.dot(tloc[bc:2 * bc], snxt_ref[...], preferred_element_type=f32)
           + jnp.dot(tloc[2 * bc:], sprv_ref[...], preferred_element_type=f32))
    att_l = jax.nn.sigmoid(y_l)                       # (BC, L2)

    # (4) mix (global att broadcast over the L*L grid) and adaptive upsample back to
    #     (BC, HW) with one bf16 MXU matmul -> lane-dense attention map (f32 accum).
    att_small = (1.0 - local_weight) * att_g + local_weight * att_l
    att_full = jnp.dot(att_small.astype(bf16), up_ref[...],
                       preferred_element_type=f32)    # (BC, HW) f32

    # (5) rescale in f32 (attention math stays f32 end-to-end), store in the input dtype.
    out = (x2.astype(f32) * att_full).astype(o_ref.dtype)
    o_ref[...] = out.reshape(bt, c, hw)


# ---------------------------------------------------------------------------
# Wrapper
# ---------------------------------------------------------------------------
def mlca_forward(x, w_global, w_local, *, local_size=5, local_weight=0.5,
                 max_rows_per_step=128):
    """x: (B, C, H, W); w_global / w_local: (k,) Conv1d(1,1,k, bias=False) weights."""
    B, C, H, W = x.shape
    L = int(local_size)
    L2 = L * L
    HW = H * W
    k = int(w_global.shape[0])
    pad = (k - 1) // 2
    assert w_local.shape[0] == k
    # With pad < C a tap can only spill into the directly adjacent spatial position,
    # which is exactly what the next/previous shift matrices model.
    assert pad < C, "channel-conv kernel must be narrower than the channel count"

    itemsize = jnp.dtype(x.dtype).itemsize

    # ---- batch tiling: Bt elements per grid step so M = Bt*C fills the MXU ----------
    Bt = 1
    for cand in range(B, 0, -1):
        if B % cand == 0 and cand * C <= max_rows_per_step \
                and cand * C * HW * itemsize <= (4 << 20):
            Bt = cand
            break
    BC = Bt * C
    steps = B // Bt

    # ---- exact AdaptiveAvgPool2d(L) and adaptive (L,L)->(H,W) upsample as linear maps --
    rp = _adaptive_pool_matrix(H, L)                       # (L, H)
    cp = _adaptive_pool_matrix(W, L)                       # (L, W)
    pool = np.einsum("ih,jw->hwij", rp, cp).reshape(HW, L2)
    ru = _adaptive_pool_matrix(L, H)                       # (H, L)
    cu = _adaptive_pool_matrix(L, W)                       # (W, L)
    up = np.einsum("hi,wj->ijhw", ru, cu).reshape(L2, HW)

    # bf16 operands for the two HW-sized matmuls (MXU-native; f32 accumulation in-kernel).
    pool = jnp.asarray(pool, dtype=jnp.bfloat16)
    up = jnp.asarray(up, dtype=jnp.bfloat16)

    # Block-diagonal (per-batch) banded channel-conv matrices, built host-side.
    eye_bt = jnp.eye(Bt, dtype=jnp.float32)
    mg_blk = jnp.kron(eye_bt, _band_matrix(w_global, C, 0)) / float(L2)   # mean folded in
    ml_vert = jnp.concatenate([
        jnp.kron(eye_bt, _band_matrix(w_local, C, 0)),    # taps within the same position
        jnp.kron(eye_bt, _band_matrix(w_local, C, +C)),   # taps wrapping to next position
        jnp.kron(eye_bt, _band_matrix(w_local, C, -C)),   # taps wrapping to prev position
    ], axis=0)                                            # (3*BC, BC)
    # Exact 0/1 position-shift matrices: (T @ s_nxt)[:, s] = T[:, s+1] (0 at the end).
    s_nxt = jnp.asarray(np.eye(L2, k=-1), dtype=jnp.float32)
    s_prv = jnp.asarray(np.eye(L2, k=+1), dtype=jnp.float32)

    # Lane-dense layout: H*W on the 128-lane axis (free reshape of contiguous NCHW).
    x_flat = x.reshape(B, C, HW)

    kernel = functools.partial(_mlca_kernel, local_weight=float(local_weight))

    # ---- VMEM budget: derived from needs, capped well below the v7x 64 MiB ----------
    tile_bytes = BC * HW * itemsize
    const_bytes = (2 * HW * L2) * 2 + (4 * BC * BC + 2 * L2 * L2) * 4
    temp_bytes = 2 * BC * HW * 4 + 8 * BC * L2 * 4        # f32 att map / rescale temps
    vmem_needed = 4 * tile_bytes + 2 * const_bytes + temp_bytes
    try:
        vmem_cap = int(0.75 * pltpu.get_tpu_info().vmem_capacity_bytes)
    except Exception:
        vmem_cap = 48 << 20
    vmem_cap = min(vmem_cap, 48 << 20)
    vmem_limit = int(min(vmem_cap, max(16 << 20, int(1.5 * vmem_needed))))

    flops_per_step = (2 * BC * HW * L2           # pooling matmul
                      + 2 * BC * BC              # global channel conv
                      + 2 * 3 * BC * BC * L2     # fused banded channel conv
                      + 2 * 2 * BC * L2 * L2     # position-shift matmuls
                      + 2 * BC * L2 * HW         # upsample matmul
                      + 2 * BC * HW)             # mix + rescale
    cost = pl.CostEstimate(
        flops=int(steps * flops_per_step),
        transcendentals=int(B * C * (L2 + 1)),   # sigmoids
        bytes_accessed=int(2 * B * C * HW * itemsize + const_bytes),
    )

    out_flat = pl.pallas_call(
        kernel,
        out_shape=jax.ShapeDtypeStruct((B, C, HW), x.dtype),
        grid_spec=pltpu.PrefetchScalarGridSpec(
            num_scalar_prefetch=0,
            grid=(steps,),
            in_specs=[
                pl.BlockSpec((HW, L2), lambda b: (0, 0)),        # pooling matrix (bf16)
                pl.BlockSpec((L2, HW), lambda b: (0, 0)),        # upsample matrix (bf16)
                pl.BlockSpec((BC, BC), lambda b: (0, 0)),        # global band (mean folded)
                pl.BlockSpec((3 * BC, BC), lambda b: (0, 0)),    # fused local bands
                pl.BlockSpec((L2, L2), lambda b: (0, 0)),        # next-position shift
                pl.BlockSpec((L2, L2), lambda b: (0, 0)),        # prev-position shift
                pl.BlockSpec((Bt, C, HW), lambda b: (b, 0, 0)),  # x (Bt batches, lane-dense)
            ],
            out_specs=pl.BlockSpec((Bt, C, HW), lambda b: (b, 0, 0)),
        ),
        compiler_params=pltpu.CompilerParams(
            dimension_semantics=("parallel",),
            vmem_limit_bytes=vmem_limit,
        ),
        cost_estimate=cost,
    )(pool, up, mg_blk, ml_vert, s_nxt, s_prv, x_flat)

    return out_flat.reshape(B, C, H, W)


# ---------------------------------------------------------------------------
# Pure-JAX reference (matches the PyTorch forward; requires H, W divisible by L so the
# adaptive pools have uniform bins — the kernel itself handles the general case).
# ---------------------------------------------------------------------------
def mlca_reference(x, w_global, w_local, *, local_size, local_weight):
    B, C, H, W = x.shape
    L = int(local_size)
    assert H % L == 0 and W % L == 0
    bh, bw = H // L, W // L
    L2 = L * L
    k = int(w_global.shape[0])
    pad = (k - 1) // 2

    xf = x.astype(jnp.float32)
    local_arv = xf.reshape(B, C, L, bh, L, bw).mean(axis=(3, 5))             # (B,C,L,L)
    global_arv = local_arv.mean(axis=(2, 3))                                 # (B,C)
    seq = local_arv.reshape(B, C, L2).transpose(0, 2, 1).reshape(B, L2 * C)  # (pos, ch)

    def conv1d_same(v, w):
        n = v.shape[1]
        vp = jnp.pad(v, ((0, 0), (pad, pad)))
        out = jnp.zeros_like(v)
        for t in range(k):
            out = out + w[t] * vp[:, t:t + n]
        return out

    y_local = conv1d_same(seq, w_local).reshape(B, L2, C).transpose(0, 2, 1)  # (B,C,L2)
    y_global = conv1d_same(global_arv, w_global)                              # (B,C)
    att_local = jax.nn.sigmoid(y_local).reshape(B, C, L, L)
    att_global = jax.nn.sigmoid(y_global)[:, :, None, None]
    att_small = (1.0 - local_weight) * att_global + local_weight * att_local  # (B,C,L,L)
    att_all = jnp.repeat(jnp.repeat(att_small, bh, axis=2), bw, axis=3)       # (B,C,H,W)
    return (xf * att_all).astype(x.dtype)


if __name__ == "__main__":
    key = jax.random.PRNGKey(0)
    kx, kg, kl = jax.random.split(key, 3)

    # Shapes consistent with the module: in_size = 32 channels -> k = 3 (odd),
    # local_size = 5 with 20x20 feature maps (divisible -> exact simple reference).
    B, C, H, W = 2, 32, 20, 20
    local_size, local_weight = 5, 0.5
    gamma, b_off = 2, 1
    t = int(abs(math.log2(C) + b_off) / gamma)
    k = t if t % 2 else t + 1          # = 3 for C = 32

    x = jax.random.normal(kx, (B, C, H, W), dtype=jnp.float32)
    w_global = 0.5 * jax.random.normal(kg, (k,), dtype=jnp.float32)
    w_local = 0.5 * jax.random.normal(kl, (k,), dtype=jnp.float32)

    out = jax.block_until_ready(
        mlca_forward(x, w_global, w_local,
                     local_size=local_size, local_weight=local_weight))
    ref = mlca_reference(x, w_global, w_local,
                         local_size=local_size, local_weight=local_weight)

    assert out.shape == x.shape
    # The pooling / upsample matmuls use bf16 MXU operands (f32 accumulation), so the
    # result carries ~bf16 relative precision vs the f32 reference.
    max_err = float(jnp.max(jnp.abs(out - ref)))
    assert jnp.allclose(out, ref, atol=1e-2, rtol=1e-2), f"max abs err = {max_err}"
    print("KERNEL_OK")
</pallas_src>

<mosaic_0001>
module attributes {stable_mosaic.version = 11 : i64} {
  func.func @_mlca_kernel(%arg0: i32, %arg1: memref<400x25xbf16, #tpu.memory_space<vmem>>, %arg2: memref<25x400xbf16, #tpu.memory_space<vmem>>, %arg3: memref<64x64xf32, #tpu.memory_space<vmem>>, %arg4: memref<192x64xf32, #tpu.memory_space<vmem>>, %arg5: memref<25x25xf32, #tpu.memory_space<vmem>>, %arg6: memref<25x25xf32, #tpu.memory_space<vmem>>, %arg7: memref<2x32x400xf32, #tpu.memory_space<vmem>>, %arg8: memref<2x32x400xf32, #tpu.memory_space<vmem>>) attributes {dimension_semantics = [#tpu.dimension_semantics<parallel>], iteration_bounds = array<i64: 1>, scalar_prefetch = 0 : i64, scratch_operands = 0 : i64, tpu.core_type = #tpu.core_type<tc>, window_params = [{pipeline_mode = #tpu.pipeline_mode<synchronous>, transform_indices = @transform_0, window_bounds = array<i64: 400, 25>}, {pipeline_mode = #tpu.pipeline_mode<synchronous>, transform_indices = @transform_1, window_bounds = array<i64: 25, 400>}, {pipeline_mode = #tpu.pipeline_mode<synchronous>, transform_indices = @transform_2, window_bounds = array<i64: 64, 64>}, {pipeline_mode = #tpu.pipeline_mode<synchronous>, transform_indices = @transform_3, window_bounds = array<i64: 192, 64>}, {pipeline_mode = #tpu.pipeline_mode<synchronous>, transform_indices = @transform_4, window_bounds = array<i64: 25, 25>}, {pipeline_mode = #tpu.pipeline_mode<synchronous>, transform_indices = @transform_5, window_bounds = array<i64: 25, 25>}, {transform_indices = @transform_6, window_bounds = array<i64: 2, 32, 400>}, {transform_indices = @transform_7, window_bounds = array<i64: 2, 32, 400>}]} {
    %c0 = arith.constant 0 : index
    %c0_0 = arith.constant 0 : index
    %c0_1 = arith.constant 0 : index
    %0 = vector.load %arg7[%c0, %c0_0, %c0_1] : memref<2x32x400xf32, #tpu.memory_space<vmem>>, vector<2x32x400xf32>
    %1 = vector.shape_cast %0 : vector<2x32x400xf32> to vector<64x400xf32>
    %2 = arith.truncf %1 : vector<64x400xf32> to vector<64x400xbf16>
    %c0_2 = arith.constant 0 : index
    %c0_3 = arith.constant 0 : index
    %3 = vector.load %arg1[%c0_2, %c0_3] : memref<400x25xbf16, #tpu.memory_space<vmem>>, vector<400x25xbf16>
    %cst = arith.constant dense<0.000000e+00> : vector<64x25xf32>
    %4 = tpu.matmul %2, %3, %cst {dimension_numbers = #tpu.dot_dimension_numbers<[1], [0], [0], [1], [0, 0, 1, 1], [], []>} : vector<64x400xbf16>, vector<400x25xbf16>, vector<64x25xf32> -> vector<64x25xf32>
    %cst_4 = arith.constant dense<0.000000e+00> : vector<64xf32>
    %5 = vector.multi_reduction <add>, %4, %cst_4 [1] : vector<64x25xf32> to vector<64xf32>
    %6 = vector.shape_cast %5 : vector<64xf32> to vector<64x1xf32>
    %c0_5 = arith.constant 0 : index
    %c0_6 = arith.constant 0 : index
    %7 = vector.load %arg3[%c0_5, %c0_6] : memref<64x64xf32, #tpu.memory_space<vmem>>, vector<64x64xf32>
    %cst_7 = arith.constant dense<0.000000e+00> : vector<64x1xf32>
    %8 = tpu.matmul %7, %6, %cst_7 {dimension_numbers = #tpu.dot_dimension_numbers<[1], [0], [0], [1], [0, 0, 1, 1], [], []>} : vector<64x64xf32>, vector<64x1xf32>, vector<64x1xf32> -> vector<64x1xf32>
    %9 = arith.negf %8 : vector<64x1xf32>
    %10 = math.exp %9 : vector<64x1xf32>
    %cst_8 = arith.constant 1.000000e+00 : f32
    %11 = vector.broadcast %cst_8 : f32 to vector<64x1xf32>
    %12 = arith.addf %11, %10 : vector<64x1xf32>
    %13 = arith.divf %11, %12 : vector<64x1xf32>
    %c0_9 = arith.constant 0 : index
    %c0_10 = arith.constant 0 : index
    %14 = vector.load %arg4[%c0_9, %c0_10] : memref<192x64xf32, #tpu.memory_space<vmem>>, vector<192x64xf32>
    %cst_11 = arith.constant dense<0.000000e+00> : vector<192x25xf32>
    %15 = tpu.matmul %14, %4, %cst_11 {dimension_numbers = #tpu.dot_dimension_numbers<[1], [0], [0], [1], [0, 0, 1, 1], [], []>} : vector<192x64xf32>, vector<64x25xf32>, vector<192x25xf32> -> vector<192x25xf32>
    %16 = vector.extract_strided_slice %15 {offsets = [0, 0], sizes = [64, 25], strides = [1, 1]} : vector<192x25xf32> to vector<64x25xf32>
    %17 = vector.extract_strided_slice %15 {offsets = [64, 0], sizes = [64, 25], strides = [1, 1]} : vector<192x25xf32> to vector<64x25xf32>
    %c0_12 = arith.constant 0 : index
    %c0_13 = arith.constant 0 : index
    %18 = vector.load %arg5[%c0_12, %c0_13] : memref<25x25xf32, #tpu.memory_space<vmem>>, vector<25x25xf32>
    %cst_14 = arith.constant dense<0.000000e+00> : vector<64x25xf32>
    %19 = tpu.matmul %17, %18, %cst_14 {dimension_numbers = #tpu.dot_dimension_numbers<[1], [0], [0], [1], [0, 0, 1, 1], [], []>} : vector<64x25xf32>, vector<25x25xf32>, vector<64x25xf32> -> vector<64x25xf32>
    %20 = arith.addf %16, %19 : vector<64x25xf32>
    %21 = vector.extract_strided_slice %15 {offsets = [128, 0], sizes = [64, 25], strides = [1, 1]} : vector<192x25xf32> to vector<64x25xf32>
    %c0_15 = arith.constant 0 : index
    %c0_16 = arith.constant 0 : index
    %22 = vector.load %arg6[%c0_15, %c0_16] : memref<25x25xf32, #tpu.memory_space<vmem>>, vector<25x25xf32>
    %cst_17 = arith.constant dense<0.000000e+00> : vector<64x25xf32>
    %23 = tpu.matmul %21, %22, %cst_17 {dimension_numbers = #tpu.dot_dimension_numbers<[1], [0], [0], [1], [0, 0, 1, 1], [], []>} : vector<64x25xf32>, vector<25x25xf32>, vector<64x25xf32> -> vector<64x25xf32>
    %24 = arith.addf %20, %23 : vector<64x25xf32>
    %25 = arith.negf %24 : vector<64x25xf32>
    %26 = math.exp %25 : vector<64x25xf32>
    %cst_18 = arith.constant 1.000000e+00 : f32
    %27 = vector.broadcast %cst_18 : f32 to vector<64x25xf32>
    %28 = arith.addf %27, %26 : vector<64x25xf32>
    %29 = arith.divf %27, %28 : vector<64x25xf32>
    %cst_19 = arith.constant 5.000000e-01 : f32
    %30 = vector.broadcast %cst_19 : f32 to vector<64x1xf32>
    %31 = arith.mulf %30, %13 : vector<64x1xf32>
    %cst_20 = arith.constant 5.000000e-01 : f32
    %32 = vector.broadcast %cst_20 : f32 to vector<64x25xf32>
    %33 = arith.mulf %32, %29 : vector<64x25xf32>
    %34 = vector.broadcast %31 : vector<64x1xf32> to vector<64x25xf32>
    %35 = arith.addf %34, %33 : vector<64x25xf32>
    %36 = arith.truncf %35 : vector<64x25xf32> to vector<64x25xbf16>
    %c0_21 = arith.constant 0 : index
    %c0_22 = arith.constant 0 : index
    %37 = vector.load %arg2[%c0_21, %c0_22] : memref<25x400xbf16, #tpu.memory_space<vmem>>, vector<25x400xbf16>
    %cst_23 = arith.constant dense<0.000000e+00> : vector<64x400xf32>
    %38 = tpu.matmul %36, %37, %cst_23 {dimension_numbers = #tpu.dot_dimension_numbers<[1], [0], [0], [1], [0, 0, 1, 1], [], []>} : vector<64x25xbf16>, vector<25x400xbf16>, vector<64x400xf32> -> vector<64x400xf32>
    %39 = arith.mulf %1, %38 : vector<64x400xf32>
    %40 = vector.shape_cast %39 : vector<64x400xf32> to vector<2x32x400xf32>
    %c0_24 = arith.constant 0 : index
    %c0_25 = arith.constant 0 : index
    %c0_26 = arith.constant 0 : index
    %41 = vector.load %arg8[%c0_24, %c0_25, %c0_26] : memref<2x32x400xf32, #tpu.memory_space<vmem>>, vector<2x32x400xf32>
    tpu.vector_store %arg8[%c0_24, %c0_25, %c0_26], %40 {strides = array<i32>} : memref<2x32x400xf32, #tpu.memory_space<vmem>>, vector<2x32x400xf32>,
    return
  }
  func.func @transform_0(%arg0: i32) -> (i32, i32) {
    %c0_i32 = arith.constant 0 : i32
    %c0_i32_0 = arith.constant 0 : i32
    %c0_i32_1 = arith.constant 0 : i32
    return %c0_i32, %c0_i32_0 : i32, i32
  }
  func.func @transform_1(%arg0: i32) -> (i32, i32) {
    %c0_i32 = arith.constant 0 : i32
    %c0_i32_0 = arith.constant 0 : i32
    %c0_i32_1 = arith.constant 0 : i32
    return %c0_i32, %c0_i32_0 : i32, i32
  }
  func.func @transform_2(%arg0: i32) -> (i32, i32) {
    %c0_i32 = arith.constant 0 : i32
    %c0_i32_0 = arith.constant 0 : i32
    %c0_i32_1 = arith.constant 0 : i32
    return %c0_i32, %c0_i32_0 : i32, i32
  }
  func.func @transform_3(%arg0: i32) -> (i32, i32) {
    %c0_i32 = arith.constant 0 : i32
    %c0_i32_0 = arith.constant 0 : i32
    %c0_i32_1 = arith.constant 0 : i32
    return %c0_i32, %c0_i32_0 : i32, i32
  }
  func.func @transform_4(%arg0: i32) -> (i32, i32) {
    %c0_i32 = arith.constant 0 : i32
    %c0_i32_0 = arith.constant 0 : i32
    %c0_i32_1 = arith.constant 0 : i32
    return %c0_i32, %c0_i32_0 : i32, i32
  }
  func.func @transform_5(%arg0: i32) -> (i32, i32) {
    %c0_i32 = arith.constant 0 : i32
    %c0_i32_0 = arith.constant 0 : i32
    %c0_i32_1 = arith.constant 0 : i32
    return %c0_i32, %c0_i32_0 : i32, i32
  }
  func.func @transform_6(%arg0: i32) -> (i32, i32, i32) {
    %c0_i32 = arith.constant 0 : i32
    %c0_i32_0 = arith.constant 0 : i32
    %c0_i32_1 = arith.constant 0 : i32
    return %arg0, %c0_i32, %c0_i32_0 : i32, i32, i32
  }
  func.func @transform_7(%arg0: i32) -> (i32, i32, i32) {
    %c0_i32 = arith.constant 0 : i32
    %c0_i32_0 = arith.constant 0 : i32
    %c0_i32_1 = arith.constant 0 : i32
    return %arg0, %c0_i32, %c0_i32_0 : i32, i32, i32
  }
}

</mosaic_0001>

<llo_original>
// kernel: tpu_custom_call.1
$region0: #{tpu_custom_call.1}
  #allocation0 [shape = 'u32[]', space=smem, size = 0x4, offset = 0x4, fixed_abs, tag = 'smem constant byte address 0x4 - core index']
  #allocation1 [shape = 'u32[72,128]{1,0:T(1,128)}', space=vmem, size = 0x9000, scoped, tag = 'internal scratch']
  %s0 = inlined_call_operand.vmem [shape: bf16[400,25], index: 0, kind: input, shape index: {}]
  %s1 = inlined_call_operand.vmem [shape: bf16[25,400], index: 1, kind: input, shape index: {}]
  %s2 = inlined_call_operand.vmem [shape: f32[64,64], index: 2, kind: input, shape index: {}]
  %s3 = inlined_call_operand.vmem [shape: f32[192,64], index: 3, kind: input, shape index: {}]
  %s4 = inlined_call_operand.vmem [shape: f32[25,25], index: 4, kind: input, shape index: {}]
  %s5 = inlined_call_operand.vmem [shape: f32[25,25], index: 5, kind: input, shape index: {}]
  %s6 = inlined_call_operand.vmem [shape: f32[2,32,400], index: 6, kind: input, shape index: {}]
  %s7 = inlined_call_operand.hbm [shape: f32[2,32,400], index: 7, kind: output, shape index: {}]
  %s8 = sld [smem:[#allocation0]]
  $region38: #{tpu_custom_call.1} parent=0
    _
  %s10 = ssub.s32 1, %s8
  %s11 = scalar_select 0, %s10, %s8
  $region1: #{tpu_custom_call.1} parent=0
    #allocation2 [shape = 'u8[131072]{0}', space=vmem, size = 0x20000, scoped, tag = 'output window, operand 0, single buffered']
    #allocation3 [shape = 's32[1]{0}', space=sflag, size = 0x4, scoped, tag = 'scoped memory for tpu_custom_call.1']
    %12 = vsyncpa [#allocation3], 0
    // Predicated region
    $region2: #{tpu_custom_call.1} parent=1 // pred_check
      _
    $region3: #{tpu_custom_call.1} parent=1 // pred_check_branch
      %14 = sbr.rel (0) target = $region5
    $region4: #{tpu_custom_call.1} parent=1 // pred_region
      _
    $region5: #{tpu_custom_call.1} parent=1 // pred_fallthru
      _
    // Predicated region
    $region6: #{tpu_custom_call.1} parent=1 // pred_check
      _
    $region7: #{tpu_custom_call.1} parent=1 // pred_check_branch
      %16 = sbr.rel (0) target = $region9
    $region8: #{tpu_custom_call.1} parent=1 // pred_region
      _
    $region9: #{tpu_custom_call.1} parent=1 // pred_fallthru
      _
    // Predicated region
    $region10: #{tpu_custom_call.1} parent=1 // pred_check
      _
    $region11: #{tpu_custom_call.1} parent=1 // pred_check_branch
      %18 = sbr.rel (0) target = $region13
    $region12: #{tpu_custom_call.1} parent=1 // pred_region
      _
    $region13: #{tpu_custom_call.1} parent=1 // pred_fallthru
      _
    // Predicated region
    $region14: #{tpu_custom_call.1} parent=1 // pred_check
      _
    $region15: #{tpu_custom_call.1} parent=1 // pred_check_branch
      %20 = sbr.rel (0) target = $region17
    $region16: #{tpu_custom_call.1} parent=1 // pred_region
      _
    $region17: #{tpu_custom_call.1} parent=1 // pred_fallthru
      _
    // Predicated region
    $region18: #{tpu_custom_call.1} parent=1 // pred_check
      _
    $region19: #{tpu_custom_call.1} parent=1 // pred_check_branch
      %22 = sbr.rel (0) target = $region21
    $region20: #{tpu_custom_call.1} parent=1 // pred_region
      _
    $region21: #{tpu_custom_call.1} parent=1 // pred_fallthru
      _
    // Predicated region
    $region22: #{tpu_custom_call.1} parent=1 // pred_check
      _
    $region23: #{tpu_custom_call.1} parent=1 // pred_check_branch
      %24 = sbr.rel (0) target = $region25
    $region24: #{tpu_custom_call.1} parent=1 // pred_region
      _
    $region25: #{tpu_custom_call.1} parent=1 // pred_fallthru
      _
    // Predicated region
    $region26: #{tpu_custom_call.1} parent=1 // pred_check
      _
    $region27: #{tpu_custom_call.1} parent=1 // pred_check_branch
      %26 = sbr.rel (0) target = $region29
    $region28: #{tpu_custom_call.1} parent=1 // pred_region
      _
    $region29: #{tpu_custom_call.1} parent=1 // pred_fallthru
      _
    %v28 = vld [vmem:[%s6] sm:$0xff]
    %v29 = vld [vmem:[%s6 + $0x8] sm:$0xff]
    %v30 = vld [vmem:[%s6 + $0x10] sm:$0xff]
    %v31 = vld [vmem:[%s6 + $0x18] sm:$0xff]
    %v32 = vld [vmem:[%s6 + $0x20] sm:$0xff]
    %v33 = vld [vmem:[%s6 + $0x28] sm:$0xff]
    %v34 = vld [vmem:[%s6 + $0x30] sm:$0xff]
    %v35 = vld [vmem:[%s6 + $0x38] sm:$0xff]
    %v36 = vld [vmem:[%s6 + $0x40] sm:$0xff]
    %v37 = vld [vmem:[%s6 + $0x48] sm:$0xff]
    %v38 = vld [vmem:[%s6 + $0x50] sm:$0xff]
    %v39 = vld [vmem:[%s6 + $0x58] sm:$0xff]
    %v40 = vld [vmem:[%s6 + $0x60] sm:$0xff]
    %v41 = vld [vmem:[%s6 + $0x68] sm:$0xff]
    %v42 = vld [vmem:[%s6 + $0x70] sm:$0xff]
    %v43 = vld [vmem:[%s6 + $0x78] sm:$0xff]
    %v44 = vld [vmem:[%s6 + $0x80] sm:$0xff]
    %v45 = vld [vmem:[%s6 + $0x88] sm:$0xff]
    %v46 = vld [vmem:[%s6 + $0x90] sm:$0xff]
    %v47 = vld [vmem:[%s6 + $0x98] sm:$0xff]
    %v48 = vld [vmem:[%s6 + $0xa0] sm:$0xff]
    %v49 = vld [vmem:[%s6 + $0xa8] sm:$0xff]
    %v50 = vld [vmem:[%s6 + $0xb0] sm:$0xff]
    %v51 = vld [vmem:[%s6 + $0xb8] sm:$0xff]
    %v52 = vld [vmem:[%s6 + $0xc0] sm:$0xff]
    %v53 = vld [vmem:[%s6 + $0xc8] sm:$0xff]
    %v54 = vld [vmem:[%s6 + $0xd0] sm:$0xff]
    %v55 = vld [vmem:[%s6 + $0xd8] sm:$0xff]
    %v56 = vld [vmem:[%s6 + $0xe0] sm:$0xff]
    %v57 = vld [vmem:[%s6 + $0xe8] sm:$0xff]
    %v58 = vld [vmem:[%s6 + $0xf0] sm:$0xff]
    %v59 = vld [vmem:[%s6 + $0xf8] sm:$0xff]
    %v60 = vpack.c.bf16 %v32, %v28
    %v61 = vpack.c.bf16 %v33, %v29
    %v62 = vpack.c.bf16 %v34, %v30
    %v63 = vpack.c.bf16 %v35, %v31
    %v64 = vpack.c.bf16 %v40, %v36
    %v65 = vpack.c.bf16 %v41, %v37
    %v66 = vpack.c.bf16 %v42, %v38
    %v67 = vpack.c.bf16 %v43, %v39
    %v68 = vpack.c.bf16 %v48, %v44
    %v69 = vpack.c.bf16 %v49, %v45
    %v70 = vpack.c.bf16 %v50, %v46
    %v71 = vpack.c.bf16 %v51, %v47
    %v72 = vpack.c.bf16 %v56, %v52
    %v73 = vpack.c.bf16 %v57, %v53
    %v74 = vpack.c.bf16 %v58, %v54
    %v75 = vpack.c.bf16 %v59, %v55
    %v76 = vld [vmem:[%s0] sm:$0xf]
    %v77 = vld [vmem:[%s0 + $0x4] sm:$0xf]
    %v78 = vld [vmem:[%s0 + $0x8] sm:$0xf]
    %v79 = vld [vmem:[%s0 + $0xc] sm:$0xf]
    %v80 = vld [vmem:[%s0 + $0x10] sm:$0xf]
    %v81 = vld [vmem:[%s0 + $0x14] sm:$0xf]
    %v82 = vld [vmem:[%s0 + $0x18] sm:$0xf]
    %v83 = vld [vmem:[%s0 + $0x1c] sm:$0xf]
    %v84 = vld [vmem:[%s0 + $0x20] sm:$0xf]
    %v85 = vld [vmem:[%s0 + $0x24] sm:$0xf]
    %v86 = vld [vmem:[%s0 + $0x28] sm:$0xf]
    %v87 = vld [vmem:[%s0 + $0x2c] sm:$0xf]
    %v88 = vld [vmem:[%s0 + $0x30] sm:$0xf]
    %v89 = vld [vmem:[%s0 + $0x34] sm:$0xf]
    %v90 = vld [vmem:[%s0 + $0x38] sm:$0xf]
    %v91 = vld [vmem:[%s0 + $0x3c] sm:$0xf]
    %v92 = vld [vmem:[%s0 + $0x40] sm:$0xf]
    %v93 = vld [vmem:[%s0 + $0x44] sm:$0xf]
    %v94 = vld [vmem:[%s0 + $0x48] sm:$0xf]
    %v95 = vld [vmem:[%s0 + $0x4c] sm:$0xf]
    %v96 = vld [vmem:[%s0 + $0x50] sm:$0xf]
    %v97 = vld [vmem:[%s0 + $0x54] sm:$0xf]
    %v98 = vld [vmem:[%s0 + $0x58] sm:$0xf]
    %v99 = vld [vmem:[%s0 + $0x5c] sm:$0xf]
    %v100 = vld [vmem:[%s0 + $0x60] sm:$0xf]
    %v101 = vld [vmem:[%s0 + $0x64] sm:$0xf]
    %v102 = vld [vmem:[%s0 + $0x68] sm:$0xf]
    %v103 = vld [vmem:[%s0 + $0x6c] sm:$0xf]
    %v104 = vld [vmem:[%s0 + $0x70] sm:$0xf]
    %v105 = vld [vmem:[%s0 + $0x74] sm:$0xf]
    %v106 = vld [vmem:[%s0 + $0x78] sm:$0xf]
    %v107 = vld [vmem:[%s0 + $0x7c] sm:$0xf]
    %v108 = vld [vmem:[%s0 + $0x80] sm:$0xf]
    %v109 = vld [vmem:[%s0 + $0x84] sm:$0xf]
    %v110 = vld [vmem:[%s0 + $0x88] sm:$0xf]
    %v111 = vld [vmem:[%s0 + $0x8c] sm:$0xf]
    %v112 = vld [vmem:[%s0 + $0x90] sm:$0xf]
    %v113 = vld [vmem:[%s0 + $0x94] sm:$0xf]
    %v114 = vld [vmem:[%s0 + $0x98] sm:$0xf]
    %v115 = vld [vmem:[%s0 + $0x9c] sm:$0xf]
    %v116 = vld [vmem:[%s0 + $0xa0] sm:$0xf]
    %v117 = vld [vmem:[%s0 + $0xa4] sm:$0xf]
    %v118 = vld [vmem:[%s0 + $0xa8] sm:$0xf]
    %v119 = vld [vmem:[%s0 + $0xac] sm:$0xf]
    %v120 = vld [vmem:[%s0 + $0xb0] sm:$0xf]
    %v121 = vld [vmem:[%s0 + $0xb4] sm:$0xf]
    %v122 = vld [vmem:[%s0 + $0xb8] sm:$0xf]
    %v123 = vld [vmem:[%s0 + $0xbc] sm:$0xf]
    %v124 = vld [vmem:[%s0 + $0xc0] sm:$0xf]
    %v125 = vld [vmem:[%s0 + $0xc4] sm:$0xf]
    %v176 = vunpack.c.l.b16 %v76
    %v177 = vunpack.c.l.b16 %v77
    %v178 = vunpack.c.l.b16 %v78
    %v179 = vunpack.c.l.b16 %v79
    %v180 = vunpack.c.l.b16 %v80
    %v181 = vunpack.c.l.b16 %v81
    %v182 = vunpack.c.l.b16 %v82
    %v183 = vunpack.c.l.b16 %v83
    %v184 = vunpack.c.l.b16 %v84
    %v185 = vunpack.c.l.b16 %v85
    %v186 = vunpack.c.l.b16 %v86
    %v187 = vunpack.c.l.b16 %v87
    %v188 = vunpack.c.l.b16 %v88
    %v189 = vunpack.c.l.b16 %v89
    %v190 = vunpack.c.l.b16 %v90
    %v191 = vunpack.c.l.b16 %v91
    %v192 = vunpack.c.l.b16 %v92
    %v193 = vunpack.c.l.b16 %v93
    %v194 = vunpack.c.l.b16 %v94
    %v195 = vunpack.c.l.b16 %v95
    %v196 = vunpack.c.l.b16 %v96
    %v197 = vunpack.c.l.b16 %v97
    %v198 = vunpack.c.l.b16 %v98
    %v199 = vunpack.c.l.b16 %v99
    %v200 = vunpack.c.l.b16 %v100
    %v201 = vunpack.c.l.b16 %v101
    %v202 = vunpack.c.l.b16 %v102
    %v203 = vunpack.c.l.b16 %v103
    %v204 = vunpack.c.l.b16 %v104
    %v205 = vunpack.c.l.b16 %v105
    %v206 = vunpack.c.l.b16 %v106
    %v207 = vunpack.c.l.b16 %v107
    %v208 = vunpack.c.l.b16 %v108
    %v209 = vunpack.c.l.b16 %v109
    %v210 = vunpack.c.l.b16 %v110
    %v211 = vunpack.c.l.b16 %v111
    %v212 = vunpack.c.l.b16 %v112
    %v213 = vunpack.c.l.b16 %v113
    %v214 = vunpack.c.l.b16 %v114
    %v215 = vunpack.c.l.b16 %v115
    %v216 = vunpack.c.l.b16 %v116
    %v217 = vunpack.c.l.b16 %v117
    %v218 = vunpack.c.l.b16 %v118
    %v219 = vunpack.c.l.b16 %v119
    %v220 = vunpack.c.l.b16 %v120
    %v221 = vunpack.c.l.b16 %v121
    %v222 = vunpack.c.l.b16 %v122
    %v223 = vunpack.c.l.b16 %v123
    %v224 = vunpack.c.l.b16 %v124
    %v225 = vunpack.c.l.b16 %v125
    %v226 = vpack.c.b16 %v177, %v176
    %v227 = vpack.c.b16 %v179, %v178
    %v228 = vpack.c.b16 %v181, %v180
    %v229 = vpack.c.b16 %v183, %v182
    %v230 = vpack.c.b16 %v185, %v184
    %v231 = vpack.c.b16 %v187, %v186
    %v232 = vpack.c.b16 %v189, %v188
    %v233 = vpack.c.b16 %v191, %v190
    %v234 = vpack.c.b16 %v193, %v192
    %v235 = vpack.c.b16 %v195, %v194
    %v236 = vpack.c.b16 %v197, %v196
    %v237 = vpack.c.b16 %v199, %v198
    %v238 = vpack.c.b16 %v201, %v200
    %v239 = vpack.c.b16 %v203, %v202
    %v240 = vpack.c.b16 %v205, %v204
    %v241 = vpack.c.b16 %v207, %v206
    %v242 = vpack.c.b16 %v209, %v208
    %v243 = vpack.c.b16 %v211, %v210
    %v244 = vpack.c.b16 %v213, %v212
    %v245 = vpack.c.b16 %v215, %v214
    %v246 = vpack.c.b16 %v217, %v216
    %v247 = vpack.c.b16 %v219, %v218
    %v248 = vpack.c.b16 %v221, %v220
    %v249 = vpack.c.b16 %v223, %v222
    %v250 = vpack.c.b16 %v225, %v224
    %vm276 = vcmask 130048
    %v278 = vsel %vm276, %v63, 0
    %v281 = vsel %vm276, %v67, 0
    %v284 = vsel %vm276, %v71, 0
    %v287 = vsel %vm276, %v75, 0
    %289 = vmatpush.bf16.msra.mxu0 %v233
    %290 = vmatpush.bf16.msra.mxu0 %v232
    %291 = vmatpush.bf16.msra.mxu0 %v231
    %292 = vmatpush.bf16.msra.mxu0 %v230
    %293 = vmatpush.bf16.msra.mxu0 %v229
    %294 = vmatpush.bf16.msra.mxu0 %v228
    %295 = vmatpush.bf16.msra.mxu0 %v227
    %296 = vmatpush.bf16.msra.mxu0 %v226
    %297 = vmatmul.bf16.gmra.mxu0 %v60
    %v298 = vpop.f32.mrf.mxu0
    %v299 = vadd.f32 0.0, %v298
    %v300 = vpop.f32.mrf.mxu0
    %v301 = vadd.f32 0.0, %v300
    %302 = vmatmul.bf16.gmra.mxu0 %v64
    %v303 = vpop.f32.mrf.mxu0
    %v304 = vadd.f32 0.0, %v303
    %v305 = vpop.f32.mrf.mxu0
    %v306 = vadd.f32 0.0, %v305
    %307 = vmatmul.bf16.gmra.mxu0 %v68
    %v308 = vpop.f32.mrf.mxu0
    %v309 = vadd.f32 0.0, %v308
    %v310 = vpop.f32.mrf.mxu0
    %v311 = vadd.f32 0.0, %v310
    %312 = vmatmul.bf16.gmra.mxu0 %v72
    %v313 = vpop.f32.mrf.mxu0
    %v314 = vadd.f32 0.0, %v313
    %v315 = vpop.f32.mrf.mxu0
    %v316 = vadd.f32 0.0, %v315
    %317 = vdwg.mxu0
    %318 = vmatpush.bf16.msra.mxu0 %v241
    %319 = vmatpush.bf16.msra.mxu0 %v240
    %320 = vmatpush.bf16.msra.mxu0 %v239
    %321 = vmatpush.bf16.msra.mxu0 %v238
    %322 = vmatpush.bf16.msra.mxu0 %v237
    %323 = vmatpush.bf16.msra.mxu0 %v236
    %324 = vmatpush.bf16.msra.mxu0 %v235
    %325 = vmatpush.bf16.msra.mxu0 %v234
    %326 = vmatmul.bf16.gmra.mxu0 %v61
    %v327 = vpop.f32.mrf.mxu0
    %v328 = vadd.f32 %v299, %v327
    %v329 = vpop.f32.mrf.mxu0
    %v330 = vadd.f32 %v301, %v329
    %331 = vmatmul.bf16.gmra.mxu0 %v65
    %v332 = vpop.f32.mrf.mxu0
    %v333 = vadd.f32 %v304, %v332
    %v334 = vpop.f32.mrf.mxu0
    %v335 = vadd.f32 %v306, %v334
    %336 = vmatmul.bf16.gmra.mxu0 %v69
    %v337 = vpop.f32.mrf.mxu0
    %v338 = vadd.f32 %v309, %v337
    %v339 = vpop.f32.mrf.mxu0
    %v340 = vadd.f32 %v311, %v339
    %341 = vmatmul.bf16.gmra.mxu0 %v73
    %v342 = vpop.f32.mrf.mxu0
    %v343 = vadd.f32 %v314, %v342
    %v344 = vpop.f32.mrf.mxu0
    %v345 = vadd.f32 %v316, %v344
    %346 = vdwg.mxu0
    %347 = vmatpush.bf16.msra.mxu0 %v249
    %348 = vmatpush.bf16.msra.mxu0 %v248
    %349 = vmatpush.bf16.msra.mxu0 %v247
    %350 = vmatpush.bf16.msra.mxu0 %v246
    %351 = vmatpush.bf16.msra.mxu0 %v245
    %352 = vmatpush.bf16.msra.mxu0 %v244
    %353 = vmatpush.bf16.msra.mxu0 %v243
    %354 = vmatpush.bf16.msra.mxu0 %v242
    %355 = vmatmul.bf16.gmra.mxu0 %v62
    %v356 = vpop.f32.mrf.mxu0
    %v357 = vadd.f32 %v328, %v356
    %v358 = vpop.f32.mrf.mxu0
    %v359 = vadd.f32 %v330, %v358
    %360 = vmatmul.bf16.gmra.mxu0 %v66
    %v361 = vpop.f32.mrf.mxu0
    %v362 = vadd.f32 %v333, %v361
    %v363 = vpop.f32.mrf.mxu0
    %v364 = vadd.f32 %v335, %v363
    %365 = vmatmul.bf16.gmra.mxu0 %v70
    %v366 = vpop.f32.mrf.mxu0
    %v367 = vadd.f32 %v338, %v366
    %v368 = vpop.f32.mrf.mxu0
    %v369 = vadd.f32 %v340, %v368
    %370 = vmatmul.bf16.gmra.mxu0 %v74
    %v371 = vpop.f32.mrf.mxu0
    %v372 = vadd.f32 %v343, %v371
    %v373 = vpop.f32.mrf.mxu0
    %v374 = vadd.f32 %v345, %v373
    %375 = vdwg.mxu0
    %376 = vmatpush.bf16.msra.mxu0 0
    %377 = vmatpush.bf16.msra.mxu0 0
    %378 = vmatpush.bf16.msra.mxu0 0
    %379 = vmatpush.bf16.msra.mxu0 0
    %380 = vmatpush.bf16.msra.mxu0 0
    %381 = vmatpush.bf16.msra.mxu0 0
    %382 = vmatpush.bf16.msra.mxu0 0
    %383 = vmatpush.bf16.msra.mxu0 %v250
    %384 = vmatmul.bf16.gmra.mxu0 %v278
    %v385 = vpop.f32.mrf.mxu0
    %v386 = vadd.f32 %v357, %v385
    %v387 = vpop.f32.mrf.mxu0
    %v388 = vadd.f32 %v359, %v387
    %389 = vmatmul.bf16.gmra.mxu0 %v281
    %v390 = vpop.f32.mrf.mxu0
    %v391 = vadd.f32 %v362, %v390
    %v392 = vpop.f32.mrf.mxu0
    %v393 = vadd.f32 %v364, %v392
    %394 = vmatmul.bf16.gmra.mxu0 %v284
    %v395 = vpop.f32.mrf.mxu0
    %v396 = vadd.f32 %v367, %v395
    %v397 = vpop.f32.mrf.mxu0
    %v398 = vadd.f32 %v369, %v397
    %399 = vmatmul.bf16.gmra.mxu0 %v287
    %v400 = vpop.f32.mrf.mxu0
    %v401 = vadd.f32 %v372, %v400
    %v402 = vpop.f32.mrf.mxu0
    %v403 = vadd.f32 %v374, %v402
    %404 = vdwg.mxu0
    %vm405 = vcmask 203776
    %v406 = vsel %vm405, %v386, 0.0
    %407 = vadd.xlane.f32.xlu0 %v406
    %v408 = vpop.xlane.xlu0 %407
    %v409 = vsel %vm405, %v388, 0.0
    %410 = vadd.xlane.f32.xlu0 %v409
    %v411 = vpop.xlane.xlu0 %410
    %v412 = vsel %vm405, %v391, 0.0
    %413 = vadd.xlane.f32.xlu0 %v412
    %v414 = vpop.xlane.xlu0 %413
    %v415 = vsel %vm405, %v393, 0.0
    %416 = vadd.xlane.f32.xlu0 %v415
    %v417 = vpop.xlane.xlu0 %416
    %v418 = vsel %vm405, %v396, 0.0
    %419 = vadd.xlane.f32.xlu0 %v418
    %v420 = vpop.xlane.xlu0 %419
    %v421 = vsel %vm405, %v398, 0.0
    %422 = vadd.xlane.f32.xlu0 %v421
    %v423 = vpop.xlane.xlu0 %422
    %v424 = vsel %vm405, %v401, 0.0
    %425 = vadd.xlane.f32.xlu0 %v424
    %v426 = vpop.xlane.xlu0 %425
    %v427 = vsel %vm405, %v403, 0.0
    %428 = vadd.xlane.f32.xlu0 %v427
    %v429 = vpop.xlane.xlu0 %428
    %v430 = vld [vmem:[%s2] sm:$0xff]
    %v431 = vld [vmem:[%s2 + $0x8] sm:$0xff]
    %v432 = vld [vmem:[%s2 + $0x10] sm:$0xff]
    %v433 = vld [vmem:[%s2 + $0x18] sm:$0xff]
    %v434 = vld [vmem:[%s2 + $0x20] sm:$0xff]
    %v435 = vld [vmem:[%s2 + $0x28] sm:$0xff]
    %v436 = vld [vmem:[%s2 + $0x30] sm:$0xff]
    %v437 = vld [vmem:[%s2 + $0x38] sm:$0xff]
    %vm438 = vcmask 523264
    %v440 = vsel %vm438, %v430, 0
    %v443 = vsel %vm438, %v431, 0
    %v446 = vsel %vm438, %v432, 0
    %v449 = vsel %vm438, %v433, 0
    %v452 = vsel %vm438, %v434, 0
    %v455 = vsel %vm438, %v435, 0
    %v458 = vsel %vm438, %v436, 0
    %v461 = vsel %vm438, %v437, 0
    %463 = vmatpush.msra.mxu0 0.0
    %464 = vmatpush.msra.mxu0 0.0
    %465 = vmatpush.msra.mxu0 0.0
    %466 = vmatpush.msra.mxu0 0.0
    %467 = vmatpush.msra.mxu0 0.0
    %468 = vmatpush.msra.mxu0 0.0
    %469 = vmatpush.msra.mxu0 0.0
    %470 = vmatpush.msra.mxu0 0.0
    %471 = vmatpush.msra.mxu0 %v429
    %472 = vmatpush.msra.mxu0 %v426
    %473 = vmatpush.msra.mxu0 %v423
    %474 = vmatpush.msra.mxu0 %v420
    %475 = vmatpush.msra.mxu0 %v417
    %476 = vmatpush.msra.mxu0 %v414
    %477 = vmatpush.msra.mxu0 %v411
    %478 = vmatpush.msra.mxu0 %v408
    %479 = vmatmul.f32.gmra.mxu0 %v440
    %v480 = vpop.f32.mrf.mxu0
    %v481 = vadd.f32 0.0, %v480
    %482 = vmatmul.f32.gmra.mxu0 %v443
    %v483 = vpop.f32.mrf.mxu0
    %v484 = vadd.f32 0.0, %v483
    %485 = vmatmul.f32.gmra.mxu0 %v446
    %v486 = vpop.f32.mrf.mxu0
    %v487 = vadd.f32 0.0, %v486
    %488 = vmatmul.f32.gmra.mxu0 %v449
    %v489 = vpop.f32.mrf.mxu0
    %v490 = vadd.f32 0.0, %v489
    %491 = vmatmul.f32.gmra.mxu0 %v452
    %v492 = vpop.f32.mrf.mxu0
    %v493 = vadd.f32 0.0, %v492
    %494 = vmatmul.f32.gmra.mxu0 %v455
    %v495 = vpop.f32.mrf.mxu0
    %v496 = vadd.f32 0.0, %v495
    %497 = vmatmul.f32.gmra.mxu0 %v458
    %v498 = vpop.f32.mrf.mxu0
    %v499 = vadd.f32 0.0, %v498
    %500 = vmatmul.f32.gmra.mxu0 %v461
    %v501 = vpop.f32.mrf.mxu0
    %v502 = vadd.f32 0.0, %v501
    %503 = vdwg.mxu0
    %v504 = vxor.u32 %v481, 2147483648
    %v505 = vxor.u32 %v484, 2147483648
    %v506 = vxor.u32 %v487, 2147483648
    %v507 = vxor.u32 %v490, 2147483648
    %v508 = vxor.u32 %v493, 2147483648
    %v509 = vxor.u32 %v496, 2147483648
    %v510 = vxor.u32 %v499, 2147483648
    %v511 = vxor.u32 %v502, 2147483648
    %v512 = vmul.f32 %v504, 1.442695
    %v513 = vpow.pop %v512
    %v514 = vmul.f32 %v505, 1.442695
    %v515 = vpow.pop %v514
    %v516 = vmul.f32 %v506, 1.442695
    %v517 = vpow.pop %v516
    %v518 = vmul.f32 %v507, 1.442695
    %v519 = vpow.pop %v518
    %v520 = vmul.f32 %v508, 1.442695
    %v521 = vpow.pop %v520
    %v522 = vmul.f32 %v509, 1.442695
    %v523 = vpow.pop %v522
    %v524 = vmul.f32 %v510, 1.442695
    %v525 = vpow.pop %v524
    %v526 = vmul.f32 %v511, 1.442695
    %v527 = vpow.pop %v526
    %v528 = vadd.f32 %v513, 1.0
    %v529 = vadd.f32 %v515, 1.0
    %v530 = vadd.f32 %v517, 1.0
    %v531 = vadd.f32 %v519, 1.0
    %v532 = vadd.f32 %v521, 1.0
    %v533 = vadd.f32 %v523, 1.0
    %v534 = vadd.f32 %v525, 1.0
    %v535 = vadd.f32 %v527, 1.0
    %v536 = vrcp.pop %v528
    %v537 = vmul.f32 %v528, %v536
    %v538 = vsub.f32 1.0, %v537
    %v539 = vmul.f32 %v536, %v538
    %v540 = vadd.f32 %v536, %v539
    %vm541 = vweird.f32 %v528
    %vm542 = vweird.f32 %v536
    %vm543 = vmor %vm541, %vm542
    %v544 = vsel %vm543, %v536, %v540
    %v545 = vand.u32 2147483647, %v528
    %vm546 = vcmp.eq.f32.partialorder %v545, 8.507059e+37
    %v547 = vand.u32 %v528, 2147483648
    %v548 = vor.u32 1.1754944e-38, %v547
    %v549 = vsel %vm546, %v548, %v544
    %v550 = vmul.f32 1.0, %v549
    %v551 = vrcp.pop %v529
    %v552 = vmul.f32 %v529, %v551
    %v553 = vsub.f32 1.0, %v552
    %v554 = vmul.f32 %v551, %v553
    %v555 = vadd.f32 %v551, %v554
    %vm556 = vweird.f32 %v529
    %vm557 = vweird.f32 %v551
    %vm558 = vmor %vm556, %vm557
    %v559 = vsel %vm558, %v551, %v555
    %v560 = vand.u32 2147483647, %v529
    %vm561 = vcmp.eq.f32.partialorder %v560, 8.507059e+37
    %v562 = vand.u32 %v529, 2147483648
    %v563 = vor.u32 1.1754944e-38, %v562
    %v564 = vsel %vm561, %v563, %v559
    %v565 = vmul.f32 1.0, %v564
    %v566 = vrcp.pop %v530
    %v567 = vmul.f32 %v530, %v566
    %v568 = vsub.f32 1.0, %v567
    %v569 = vmul.f32 %v566, %v568
    %v570 = vadd.f32 %v566, %v569
    %vm571 = vweird.f32 %v530
    %vm572 = vweird.f32 %v566
    %vm573 = vmor %vm571, %vm572
    %v574 = vsel %vm573, %v566, %v570
    %v575 = vand.u32 2147483647, %v530
    %vm576 = vcmp.eq.f32.partialorder %v575, 8.507059e+37
    %v577 = vand.u32 %v530, 2147483648
    %v578 = vor.u32 1.1754944e-38, %v577
    %v579 = vsel %vm576, %v578, %v574
    %v580 = vmul.f32 1.0, %v579
    %v581 = vrcp.pop %v531
    %v582 = vmul.f32 %v531, %v581
    %v583 = vsub.f32 1.0, %v582
    %v584 = vmul.f32 %v581, %v583
    %v585 = vadd.f32 %v581, %v584
    %vm586 = vweird.f32 %v531
    %vm587 = vweird.f32 %v581
    %vm588 = vmor %vm586, %vm587
    %v589 = vsel %vm588, %v581, %v585
    %v590 = vand.u32 2147483647, %v531
    %vm591 = vcmp.eq.f32.partialorder %v590, 8.507059e+37
    %v592 = vand.u32 %v531, 2147483648
    %v593 = vor.u32 1.1754944e-38, %v592
    %v594 = vsel %vm591, %v593, %v589
    %v595 = vmul.f32 1.0, %v594
    %v596 = vrcp.pop %v532
    %v597 = vmul.f32 %v532, %v596
    %v598 = vsub.f32 1.0, %v597
    %v599 = vmul.f32 %v596, %v598
    %v600 = vadd.f32 %v596, %v599
    %vm601 = vweird.f32 %v532
    %vm602 = vweird.f32 %v596
    %vm603 = vmor %vm601, %vm602
    %v604 = vsel %vm603, %v596, %v600
    %v605 = vand.u32 2147483647, %v532
    %vm606 = vcmp.eq.f32.partialorder %v605, 8.507059e+37
    %v607 = vand.u32 %v532, 2147483648
    %v608 = vor.u32 1.1754944e-38, %v607
    %v609 = vsel %vm606, %v608, %v604
    %v610 = vmul.f32 1.0, %v609
    %v611 = vrcp.pop %v533
    %v612 = vmul.f32 %v533, %v611
    %v613 = vsub.f32 1.0, %v612
    %v614 = vmul.f32 %v611, %v613
    %v615 = vadd.f32 %v611, %v614
    %vm616 = vweird.f32 %v533
    %vm617 = vweird.f32 %v611
    %vm618 = vmor %vm616, %vm617
    %v619 = vsel %vm618, %v611, %v615
    %v620 = vand.u32 2147483647, %v533
    %vm621 = vcmp.eq.f32.partialorder %v620, 8.507059e+37
    %v622 = vand.u32 %v533, 2147483648
    %v623 = vor.u32 1.1754944e-38, %v622
    %v624 = vsel %vm621, %v623, %v619
    %v625 = vmul.f32 1.0, %v624
    %v626 = vrcp.pop %v534
    %v627 = vmul.f32 %v534, %v626
    %v628 = vsub.f32 1.0, %v627
    %v629 = vmul.f32 %v626, %v628
    %v630 = vadd.f32 %v626, %v629
    %vm631 = vweird.f32 %v534
    %vm632 = vweird.f32 %v626
    %vm633 = vmor %vm631, %vm632
    %v634 = vsel %vm633, %v626, %v630
    %v635 = vand.u32 2147483647, %v534
    %vm636 = vcmp.eq.f32.partialorder %v635, 8.507059e+37
    %v637 = vand.u32 %v534, 2147483648
    %v638 = vor.u32 1.1754944e-38, %v637
    %v639 = vsel %vm636, %v638, %v634
    %v640 = vmul.f32 1.0, %v639
    %v641 = vrcp.pop %v535
    %v642 = vmul.f32 %v535, %v641
    %v643 = vsub.f32 1.0, %v642
    %v644 = vmul.f32 %v641, %v643
    %v645 = vadd.f32 %v641, %v644
    %vm646 = vweird.f32 %v535
    %vm647 = vweird.f32 %v641
    %vm648 = vmor %vm646, %vm647
    %v649 = vsel %vm648, %v641, %v645
    %v650 = vand.u32 2147483647, %v535
    %vm651 = vcmp.eq.f32.partialorder %v650, 8.507059e+37
    %v652 = vand.u32 %v535, 2147483648
    %v653 = vor.u32 1.1754944e-38, %v652
    %v654 = vsel %vm651, %v653, %v649
    %v655 = vmul.f32 1.0, %v654
    %v656 = vld [vmem:[%s3] sm:$0xff]
    %v657 = vld [vmem:[%s3 + $0x8] sm:$0xff]
    %v658 = vld [vmem:[%s3 + $0x10] sm:$0xff]
    %v659 = vld [vmem:[%s3 + $0x18] sm:$0xff]
    %v660 = vld [vmem:[%s3 + $0x20] sm:$0xff]
    %v661 = vld [vmem:[%s3 + $0x28] sm:$0xff]
    %v662 = vld [vmem:[%s3 + $0x30] sm:$0xff]
    %v663 = vld [vmem:[%s3 + $0x38] sm:$0xff]
    %v664 = vld [vmem:[%s3 + $0x40] sm:$0xff]
    %v665 = vld [vmem:[%s3 + $0x48] sm:$0xff]
    %v666 = vld [vmem:[%s3 + $0x50] sm:$0xff]
    %v667 = vld [vmem:[%s3 + $0x58] sm:$0xff]
    %v668 = vld [vmem:[%s3 + $0x60] sm:$0xff]
    %v669 = vld [vmem:[%s3 + $0x68] sm:$0xff]
    %v670 = vld [vmem:[%s3 + $0x70] sm:$0xff]
    %v671 = vld [vmem:[%s3 + $0x78] sm:$0xff]
    %v672 = vld [vmem:[%s3 + $0x80] sm:$0xff]
    %v673 = vld [vmem:[%s3 + $0x88] sm:$0xff]
    %v674 = vld [vmem:[%s3 + $0x90] sm:$0xff]
    %v675 = vld [vmem:[%s3 + $0x98] sm:$0xff]
    %v676 = vld [vmem:[%s3 + $0xa0] sm:$0xff]
    %v677 = vld [vmem:[%s3 + $0xa8] sm:$0xff]
    %v678 = vld [vmem:[%s3 + $0xb0] sm:$0xff]
    %v679 = vld [vmem:[%s3 + $0xb8] sm:$0xff]
    %v681 = vsel %vm438, %v656, 0
    %v684 = vsel %vm438, %v657, 0
    %v687 = vsel %vm438, %v658, 0
    %v690 = vsel %vm438, %v659, 0
    %v693 = vsel %vm438, %v660, 0
    %v696 = vsel %vm438, %v661, 0
    %v699 = vsel %vm438, %v662, 0
    %v702 = vsel %vm438, %v663, 0
    %v705 = vsel %vm438, %v664, 0
    %v708 = vsel %vm438, %v665, 0
    %v711 = vsel %vm438, %v666, 0
    %v714 = vsel %vm438, %v667, 0
    %v717 = vsel %vm438, %v668, 0
    %v720 = vsel %vm438, %v669, 0
    %v723 = vsel %vm438, %v670, 0
    %v726 = vsel %vm438, %v671, 0
    %v729 = vsel %vm438, %v672, 0
    %v732 = vsel %vm438, %v673, 0
    %v735 = vsel %vm438, %v674, 0
    %v738 = vsel %vm438, %v675, 0
    %v741 = vsel %vm438, %v676, 0
    %v744 = vsel %vm438, %v677, 0
    %v747 = vsel %vm438, %v678, 0
    %v750 = vsel %vm438, %v679, 0
    %752 = vmatpush.msra.mxu0 0.0
    %753 = vmatpush.msra.mxu0 0.0
    %754 = vmatpush.msra.mxu0 0.0
    %755 = vmatpush.msra.mxu0 0.0
    %756 = vmatpush.msra.mxu0 0.0
    %757 = vmatpush.msra.mxu0 0.0
    %758 = vmatpush.msra.mxu0 0.0
    %759 = vmatpush.msra.mxu0 0.0
    %760 = vmatpush.msra.mxu0 %v403
    %761 = vmatpush.msra.mxu0 %v401
    %762 = vmatpush.msra.mxu0 %v398
    %763 = vmatpush.msra.mxu0 %v396
    %764 = vmatpush.msra.mxu0 %v393
    %765 = vmatpush.msra.mxu0 %v391
    %766 = vmatpush.msra.mxu0 %v388
    %767 = vmatpush.msra.mxu0 %v386
    %768 = vmatmul.f32.gmra.mxu0 %v681
    %v769 = vpop.f32.mrf.mxu0
    %v770 = vadd.f32 0.0, %v769
    %771 = vmatmul.f32.gmra.mxu0 %v684
    %v772 = vpop.f32.mrf.mxu0
    %v773 = vadd.f32 0.0, %v772
    %774 = vmatmul.f32.gmra.mxu0 %v687
    %v775 = vpop.f32.mrf.mxu0
    %v776 = vadd.f32 0.0, %v775
    %777 = vmatmul.f32.gmra.mxu0 %v690
    %v778 = vpop.f32.mrf.mxu0
    %v779 = vadd.f32 0.0, %v778
    %780 = vmatmul.f32.gmra.mxu0 %v693
    %v781 = vpop.f32.mrf.mxu0
    %v782 = vadd.f32 0.0, %v781
    %783 = vmatmul.f32.gmra.mxu0 %v696
    %v784 = vpop.f32.mrf.mxu0
    %v785 = vadd.f32 0.0, %v784
    %786 = vmatmul.f32.gmra.mxu0 %v699
    %v787 = vpop.f32.mrf.mxu0
    %v788 = vadd.f32 0.0, %v787
    %789 = vmatmul.f32.gmra.mxu0 %v702
    %v790 = vpop.f32.mrf.mxu0
    %v791 = vadd.f32 0.0, %v790
    %792 = vmatmul.f32.gmra.mxu0 %v705
    %v793 = vpop.f32.mrf.mxu0
    %v794 = vadd.f32 0.0, %v793
    %795 = vmatmul.f32.gmra.mxu0 %v708
    %v796 = vpop.f32.mrf.mxu0
    %v797 = vadd.f32 0.0, %v796
    %798 = vmatmul.f32.gmra.mxu0 %v711
    %v799 = vpop.f32.mrf.mxu0
    %v800 = vadd.f32 0.0, %v799
    %801 = vmatmul.f32.gmra.mxu0 %v714
    %v802 = vpop.f32.mrf.mxu0
    %v803 = vadd.f32 0.0, %v802
    %804 = vmatmul.f32.gmra.mxu0 %v717
    %v805 = vpop.f32.mrf.mxu0
    %v806 = vadd.f32 0.0, %v805
    %807 = vmatmul.f32.gmra.mxu0 %v720
    %v808 = vpop.f32.mrf.mxu0
    %v809 = vadd.f32 0.0, %v808
    %810 = vmatmul.f32.gmra.mxu0 %v723
    %v811 = vpop.f32.mrf.mxu0
    %v812 = vadd.f32 0.0, %v811
    %813 = vmatmul.f32.gmra.mxu0 %v726
    %v814 = vpop.f32.mrf.mxu0
    %v815 = vadd.f32 0.0, %v814
    %816 = vmatmul.f32.gmra.mxu0 %v729
    %v817 = vpop.f32.mrf.mxu0
    %v818 = vadd.f32 0.0, %v817
    %819 = vmatmul.f32.gmra.mxu0 %v732
    %v820 = vpop.f32.mrf.mxu0
    %v821 = vadd.f32 0.0, %v820
    %822 = vmatmul.f32.gmra.mxu0 %v735
    %v823 = vpop.f32.mrf.mxu0
    %v824 = vadd.f32 0.0, %v823
    %825 = vmatmul.f32.gmra.mxu0 %v738
    %v826 = vpop.f32.mrf.mxu0
    %v827 = vadd.f32 0.0, %v826
    %828 = vmatmul.f32.gmra.mxu0 %v741
    %v829 = vpop.f32.mrf.mxu0
    %v830 = vadd.f32 0.0, %v829
    %831 = vmatmul.f32.gmra.mxu0 %v744
    %v832 = vpop.f32.mrf.mxu0
    %v833 = vadd.f32 0.0, %v832
    %834 = vmatmul.f32.gmra.mxu0 %v747
    %v835 = vpop.f32.mrf.mxu0
    %v836 = vadd.f32 0.0, %v835
    %837 = vmatmul.f32.gmra.mxu0 %v750
    %v838 = vpop.f32.mrf.mxu0
    %v839 = vadd.f32 0.0, %v838
    %840 = vdwg.mxu0
    %v841 = vld [vmem:[%s4] sm:$0xff]
    %v842 = vld [vmem:[%s4 + $0x8] sm:$0xff]
    %v843 = vld [vmem:[%s4 + $0x10] sm:$0xff]
    %v844 = vld [vmem:[%s4 + $0x18] sm:$0x1]
    %v846 = vsel %vm405, %v794, 0
    %v849 = vsel %vm405, %v797, 0
    %v852 = vsel %vm405, %v800, 0
    %v855 = vsel %vm405, %v803, 0
    %v858 = vsel %vm405, %v806, 0
    %v861 = vsel %vm405, %v809, 0
    %v864 = vsel %vm405, %v812, 0
    %v867 = vsel %vm405, %v815, 0
    %vm869 = vcmask 1040384
    %v871 = vsel %vm869, %v844, 0
    %873 = vmatpush.msra.mxu0 0.0
    %874 = vmatpush.msra.mxu0 0.0
    %875 = vmatpush.msra.mxu0 0.0
    %876 = vmatpush.msra.mxu0 0.0
    %877 = vmatpush.msra.mxu0 0.0
    %878 = vmatpush.msra.mxu0 0.0
    %879 = vmatpush.msra.mxu0 0.0
    %880 = vmatpush.msra.mxu0 0.0
    %881 = vmatpush.msra.mxu0 0.0
    %882 = vmatpush.msra.mxu0 0.0
    %883 = vmatpush.msra.mxu0 0.0
    %884 = vmatpush.msra.mxu0 0.0
    %885 = vmatpush.msra.mxu0 %v871
    %886 = vmatpush.msra.mxu0 %v843
    %887 = vmatpush.msra.mxu0 %v842
    %888 = vmatpush.msra.mxu0 %v841
    %889 = vmatmul.f32.gmra.mxu0 %v846
    %v890 = vpop.f32.mrf.mxu0
    %v891 = vadd.f32 0.0, %v890
    %892 = vmatmul.f32.gmra.mxu0 %v849
    %v893 = vpop.f32.mrf.mxu0
    %v894 = vadd.f32 0.0, %v893
    %895 = vmatmul.f32.gmra.mxu0 %v852
    %v896 = vpop.f32.mrf.mxu0
    %v897 = vadd.f32 0.0, %v896
    %898 = vmatmul.f32.gmra.mxu0 %v855
    %v899 = vpop.f32.mrf.mxu0
    %v900 = vadd.f32 0.0, %v899
    %901 = vmatmul.f32.gmra.mxu0 %v858
    %v902 = vpop.f32.mrf.mxu0
    %v903 = vadd.f32 0.0, %v902
    %904 = vmatmul.f32.gmra.mxu0 %v861
    %v905 = vpop.f32.mrf.mxu0
    %v906 = vadd.f32 0.0, %v905
    %907 = vmatmul.f32.gmra.mxu0 %v864
    %v908 = vpop.f32.mrf.mxu0
    %v909 = vadd.f32 0.0, %v908
    %910 = vmatmul.f32.gmra.mxu0 %v867
    %v911 = vpop.f32.mrf.mxu0
    %v912 = vadd.f32 0.0, %v911
    %913 = vdwg.mxu0
    %v914 = vadd.f32 %v770, %v891
    %v915 = vadd.f32 %v773, %v894
    %v916 = vadd.f32 %v776, %v897
    %v917 = vadd.f32 %v779, %v900
    %v918 = vadd.f32 %v782, %v903
    %v919 = vadd.f32 %v785, %v906
    %v920 = vadd.f32 %v788, %v909
    %v921 = vadd.f32 %v791, %v912
    %v922 = vld [vmem:[%s5] sm:$0xff]
    %v923 = vld [vmem:[%s5 + $0x8] sm:$0xff]
    %v924 = vld [vmem:[%s5 + $0x10] sm:$0xff]
    %v925 = vld [vmem:[%s5 + $0x18] sm:$0x1]
    %v927 = vsel %vm405, %v818, 0
    %v930 = vsel %vm405, %v821, 0
    %v933 = vsel %vm405, %v824, 0
    %v936 = vsel %vm405, %v827, 0
    %v939 = vsel %vm405, %v830, 0
    %v942 = vsel %vm405, %v833, 0
    %v945 = vsel %vm405, %v836, 0
    %v948 = vsel %vm405, %v839, 0
    %v951 = vsel %vm869, %v925, 0
    %953 = vmatpush.msra.mxu0 0.0
    %954 = vmatpush.msra.mxu0 0.0
    %955 = vmatpush.msra.mxu0 0.0
    %956 = vmatpush.msra.mxu0 0.0
    %957 = vmatpush.msra.mxu0 0.0
    %958 = vmatpush.msra.mxu0 0.0
    %959 = vmatpush.msra.mxu0 0.0
    %960 = vmatpush.msra.mxu0 0.0
    %961 = vmatpush.msra.mxu0 0.0
    %962 = vmatpush.msra.mxu0 0.0
    %963 = vmatpush.msra.mxu0 0.0
    %964 = vmatpush.msra.mxu0 0.0
    %965 = vmatpush.msra.mxu0 %v951
    %966 = vmatpush.msra.mxu0 %v924
    %967 = vmatpush.msra.mxu0 %v923
    %968 = vmatpush.msra.mxu0 %v922
    %969 = vmatmul.f32.gmra.mxu0 %v927
    %v970 = vpop.f32.mrf.mxu0
    %v971 = vadd.f32 0.0, %v970
    %972 = vmatmul.f32.gmra.mxu0 %v930
    %v973 = vpop.f32.mrf.mxu0
    %v974 = vadd.f32 0.0, %v973
    %975 = vmatmul.f32.gmra.mxu0 %v933
    %v976 = vpop.f32.mrf.mxu0
    %v977 = vadd.f32 0.0, %v976
    %978 = vmatmul.f32.gmra.mxu0 %v936
    %v979 = vpop.f32.mrf.mxu0
    %v980 = vadd.f32 0.0, %v979
    %981 = vmatmul.f32.gmra.mxu0 %v939
    %v982 = vpop.f32.mrf.mxu0
    %v983 = vadd.f32 0.0, %v982
    %984 = vmatmul.f32.gmra.mxu0 %v942
    %v985 = vpop.f32.mrf.mxu0
    %v986 = vadd.f32 0.0, %v985
    %987 = vmatmul.f32.gmra.mxu0 %v945
    %v988 = vpop.f32.mrf.mxu0
    %v989 = vadd.f32 0.0, %v988
    %990 = vmatmul.f32.gmra.mxu0 %v948
    %v991 = vpop.f32.mrf.mxu0
    %v992 = vadd.f32 0.0, %v991
    %993 = vdwg.mxu0
    %v994 = vadd.f32 %v914, %v971
    %v995 = vadd.f32 %v915, %v974
    %v996 = vadd.f32 %v916, %v977
    %v997 = vadd.f32 %v917, %v980
    %v998 = vadd.f32 %v918, %v983
    %v999 = vadd.f32 %v919, %v986
    %v1000 = vadd.f32 %v920, %v989
    %v1001 = vadd.f32 %v921, %v992
    %v1002 = vxor.u32 %v994, 2147483648
    %v1003 = vxor.u32 %v995, 2147483648
    %v1004 = vxor.u32 %v996, 2147483648
    %v1005 = vxor.u32 %v997, 2147483648
    %v1006 = vxor.u32 %v998, 2147483648
    %v1007 = vxor.u32 %v999, 2147483648
    %v1008 = vxor.u32 %v1000, 2147483648
    %v1009 = vxor.u32 %v1001, 2147483648
    %v1010 = vmul.f32 %v1002, 1.442695
    %v1011 = vpow.pop %v1010
    %v1012 = vmul.f32 %v1003, 1.442695
    %v1013 = vpow.pop %v1012
    %v1014 = vmul.f32 %v1004, 1.442695
    %v1015 = vpow.pop %v1014
    %v1016 = vmul.f32 %v1005, 1.442695
    %v1017 = vpow.pop %v1016
    %v1018 = vmul.f32 %v1006, 1.442695
    %v1019 = vpow.pop %v1018
    %v1020 = vmul.f32 %v1007, 1.442695
    %v1021 = vpow.pop %v1020
    %v1022 = vmul.f32 %v1008, 1.442695
    %v1023 = vpow.pop %v1022
    %v1024 = vmul.f32 %v1009, 1.442695
    %v1025 = vpow.pop %v1024
    %v1026 = vadd.f32 %v1011, 1.0
    %v1027 = vadd.f32 %v1013, 1.0
    %v1028 = vadd.f32 %v1015, 1.0
    %v1029 = vadd.f32 %v1017, 1.0
    %v1030 = vadd.f32 %v1019, 1.0
    %v1031 = vadd.f32 %v1021, 1.0
    %v1032 = vadd.f32 %v1023, 1.0
    %v1033 = vadd.f32 %v1025, 1.0
    %v1034 = vrcp.pop %v1026
    %v1035 = vmul.f32 %v1026, %v1034
    %v1036 = vsub.f32 1.0, %v1035
    %v1037 = vmul.f32 %v1034, %v1036
    %v1038 = vadd.f32 %v1034, %v1037
    %vm1039 = vweird.f32 %v1026
    %vm1040 = vweird.f32 %v1034
    %vm1041 = vmor %vm1039, %vm1040
    %v1042 = vsel %vm1041, %v1034, %v1038
    %v1043 = vand.u32 2147483647, %v1026
    %vm1044 = vcmp.eq.f32.partialorder %v1043, 8.507059e+37
    %v1045 = vand.u32 %v1026, 2147483648
    %v1046 = vor.u32 1.1754944e-38, %v1045
    %v1047 = vsel %vm1044, %v1046, %v1042
    %v1048 = vmul.f32 1.0, %v1047
    %v1049 = vrcp.pop %v1027
    %v1050 = vmul.f32 %v1027, %v1049
    %v1051 = vsub.f32 1.0, %v1050
    %v1052 = vmul.f32 %v1049, %v1051
    %v1053 = vadd.f32 %v1049, %v1052
    %vm1054 = vweird.f32 %v1027
    %vm1055 = vweird.f32 %v1049
    %vm1056 = vmor %vm1054, %vm1055
    %v1057 = vsel %vm1056, %v1049, %v1053
    %v1058 = vand.u32 2147483647, %v1027
    %vm1059 = vcmp.eq.f32.partialorder %v1058, 8.507059e+37
    %v1060 = vand.u32 %v1027, 2147483648
    %v1061 = vor.u32 1.1754944e-38, %v1060
    %v1062 = vsel %vm1059, %v1061, %v1057
    %v1063 = vmul.f32 1.0, %v1062
    %v1064 = vrcp.pop %v1028
    %v1065 = vmul.f32 %v1028, %v1064
    %v1066 = vsub.f32 1.0, %v1065
    %v1067 = vmul.f32 %v1064, %v1066
    %v1068 = vadd.f32 %v1064, %v1067
    %vm1069 = vweird.f32 %v1028
    %vm1070 = vweird.f32 %v1064
    %vm1071 = vmor %vm1069, %vm1070
    %v1072 = vsel %vm1071, %v1064, %v1068
    %v1073 = vand.u32 2147483647, %v1028
    %vm1074 = vcmp.eq.f32.partialorder %v1073, 8.507059e+37
    %v1075 = vand.u32 %v1028, 2147483648
    %v1076 = vor.u32 1.1754944e-38, %v1075
    %v1077 = vsel %vm1074, %v1076, %v1072
    %v1078 = vmul.f32 1.0, %v1077
    %v1079 = vrcp.pop %v1029
    %v1080 = vmul.f32 %v1029, %v1079
    %v1081 = vsub.f32 1.0, %v1080
    %v1082 = vmul.f32 %v1079, %v1081
    %v1083 = vadd.f32 %v1079, %v1082
    %vm1084 = vweird.f32 %v1029
    %vm1085 = vweird.f32 %v1079
    %vm1086 = vmor %vm1084, %vm1085
    %v1087 = vsel %vm1086, %v1079, %v1083
    %v1088 = vand.u32 2147483647, %v1029
    %vm1089 = vcmp.eq.f32.partialorder %v1088, 8.507059e+37
    %v1090 = vand.u32 %v1029, 2147483648
    %v1091 = vor.u32 1.1754944e-38, %v1090
    %v1092 = vsel %vm1089, %v1091, %v1087
    %v1093 = vmul.f32 1.0, %v1092
    %v1094 = vrcp.pop %v1030
    %v1095 = vmul.f32 %v1030, %v1094
    %v1096 = vsub.f32 1.0, %v1095
    %v1097 = vmul.f32 %v1094, %v1096
    %v1098 = vadd.f32 %v1094, %v1097
    %vm1099 = vweird.f32 %v1030
    %vm1100 = vweird.f32 %v1094
    %vm1101 = vmor %vm1099, %vm1100
    %v1102 = vsel %vm1101, %v1094, %v1098
    %v1103 = vand.u32 2147483647, %v1030
    %vm1104 = vcmp.eq.f32.partialorder %v1103, 8.507059e+37
    %v1105 = vand.u32 %v1030, 2147483648
    %v1106 = vor.u32 1.1754944e-38, %v1105
    %v1107 = vsel %vm1104, %v1106, %v1102
    %v1108 = vmul.f32 1.0, %v1107
    %v1109 = vrcp.pop %v1031
    %v1110 = vmul.f32 %v1031, %v1109
    %v1111 = vsub.f32 1.0, %v1110
    %v1112 = vmul.f32 %v1109, %v1111
    %v1113 = vadd.f32 %v1109, %v1112
    %vm1114 = vweird.f32 %v1031
    %vm1115 = vweird.f32 %v1109
    %vm1116 = vmor %vm1114, %vm1115
    %v1117 = vsel %vm1116, %v1109, %v1113
    %v1118 = vand.u32 2147483647, %v1031
    %vm1119 = vcmp.eq.f32.partialorder %v1118, 8.507059e+37
    %v1120 = vand.u32 %v1031, 2147483648
    %v1121 = vor.u32 1.1754944e-38, %v1120
    %v1122 = vsel %vm1119, %v1121, %v1117
    %v1123 = vmul.f32 1.0, %v1122
    %v1124 = vrcp.pop %v1032
    %v1125 = vmul.f32 %v1032, %v1124
    %v1126 = vsub.f32 1.0, %v1125
    %v1127 = vmul.f32 %v1124, %v1126
    %v1128 = vadd.f32 %v1124, %v1127
    %vm1129 = vweird.f32 %v1032
    %vm1130 = vweird.f32 %v1124
    %vm1131 = vmor %vm1129, %vm1130
    %v1132 = vsel %vm1131, %v1124, %v1128
    %v1133 = vand.u32 2147483647, %v1032
    %vm1134 = vcmp.eq.f32.partialorder %v1133, 8.507059e+37
    %v1135 = vand.u32 %v1032, 2147483648
    %v1136 = vor.u32 1.1754944e-38, %v1135
    %v1137 = vsel %vm1134, %v1136, %v1132
    %v1138 = vmul.f32 1.0, %v1137
    %v1139 = vrcp.pop %v1033
    %v1140 = vmul.f32 %v1033, %v1139
    %v1141 = vsub.f32 1.0, %v1140
    %v1142 = vmul.f32 %v1139, %v1141
    %v1143 = vadd.f32 %v1139, %v1142
    %vm1144 = vweird.f32 %v1033
    %vm1145 = vweird.f32 %v1139
    %vm1146 = vmor %vm1144, %vm1145
    %v1147 = vsel %vm1146, %v1139, %v1143
    %v1148 = vand.u32 2147483647, %v1033
    %vm1149 = vcmp.eq.f32.partialorder %v1148, 8.507059e+37
    %v1150 = vand.u32 %v1033, 2147483648
    %v1151 = vor.u32 1.1754944e-38, %v1150
    %v1152 = vsel %vm1149, %v1151, %v1147
    %v1153 = vmul.f32 1.0, %v1152
    %v1154 = vmul.f32 %v550, 0.5
    %v1155 = vmul.f32 %v565, 0.5
    %v1156 = vmul.f32 %v580, 0.5
    %v1157 = vmul.f32 %v595, 0.5
    %v1158 = vmul.f32 %v610, 0.5
    %v1159 = vmul.f32 %v625, 0.5
    %v1160 = vmul.f32 %v640, 0.5
    %v1161 = vmul.f32 %v655, 0.5
    %v1162 = vmul.f32 %v1048, 0.5
    %v1163 = vmul.f32 %v1063, 0.5
    %v1164 = vmul.f32 %v1078, 0.5
    %v1165 = vmul.f32 %v1093, 0.5
    %v1166 = vmul.f32 %v1108, 0.5
    %v1167 = vmul.f32 %v1123, 0.5
    %v1168 = vmul.f32 %v1138, 0.5
    %v1169 = vmul.f32 %v1153, 0.5
    %1171 = vset.pattern.permute.xlu0 0
    %1172 = vperm.xlu0 %1171, %v1154
    %v1173 = vpop.permute.xlu0 %1172
    %1176 = vset.pattern.permute.xlu0 0
    %1177 = vperm.xlu0 %1176, %v1155
    %v1178 = vpop.permute.xlu0 %1177
    %1181 = vset.pattern.permute.xlu0 0
    %1182 = vperm.xlu0 %1181, %v1156
    %v1183 = vpop.permute.xlu0 %1182
    %1186 = vset.pattern.permute.xlu0 0
    %1187 = vperm.xlu0 %1186, %v1157
    %v1188 = vpop.permute.xlu0 %1187
    %1191 = vset.pattern.permute.xlu0 0
    %1192 = vperm.xlu0 %1191, %v1158
    %v1193 = vpop.permute.xlu0 %1192
    %1196 = vset.pattern.permute.xlu0 0
    %1197 = vperm.xlu0 %1196, %v1159
    %v1198 = vpop.permute.xlu0 %1197
    %1201 = vset.pattern.permute.xlu0 0
    %1202 = vperm.xlu0 %1201, %v1160
    %v1203 = vpop.permute.xlu0 %1202
    %1206 = vset.pattern.permute.xlu0 0
    %1207 = vperm.xlu0 %1206, %v1161
    %v1208 = vpop.permute.xlu0 %1207
    %v1210 = vadd.f32 %v1173, %v1162
    %v1211 = vadd.f32 %v1178, %v1163
    %v1212 = vadd.f32 %v1183, %v1164
    %v1213 = vadd.f32 %v1188, %v1165
    %v1214 = vadd.f32 %v1193, %v1166
    %v1215 = vadd.f32 %v1198, %v1167
    %v1216 = vadd.f32 %v1203, %v1168
    %v1217 = vadd.f32 %v1208, %v1169
    %v1218 = vpack.c.bf16 %v1211, %v1210
    %v1219 = vpack.c.bf16 %v1213, %v1212
    %v1220 = vpack.c.bf16 %v1215, %v1214
    %v1221 = vpack.c.bf16 %v1217, %v1216
    %v1222 = vld [vmem:[%s1] sm:$0xff]
    %v1223 = vld [vmem:[%s1 + $0x8] sm:$0xff]
    %v1224 = vld [vmem:[%s1 + $0x10] sm:$0xff]
    %v1225 = vld [vmem:[%s1 + $0x18] sm:$0xff]
    %v1226 = vld [vmem:[%s1 + $0x20] sm:$0xff]
    %v1227 = vld [vmem:[%s1 + $0x28] sm:$0xff]
    %v1228 = vld [vmem:[%s1 + $0x30] sm:$0x11]
    %v1229 = vld [vmem:[%s1 + $0x38] sm:$0x11]
    %v1238 = vunpack.c.l.b16 %v1222
    %v1239 = vunpack.c.h.b16 %v1222
    %v1240 = vunpack.c.l.b16 %v1223
    %v1241 = vunpack.c.h.b16 %v1223
    %v1242 = vunpack.c.l.b16 %v1224
    %v1243 = vunpack.c.h.b16 %v1224
    %v1244 = vunpack.c.l.b16 %v1225
    %v1245 = vunpack.c.h.b16 %v1225
    %v1246 = vunpack.c.l.b16 %v1226
    %v1247 = vunpack.c.h.b16 %v1226
    %v1248 = vunpack.c.l.b16 %v1227
    %v1249 = vunpack.c.h.b16 %v1227
    %v1250 = vunpack.c.l.b16 %v1228
    %v1251 = vunpack.c.h.b16 %v1228
    %v1252 = vunpack.c.l.b16 %v1229
    %v1253 = vunpack.c.h.b16 %v1229
    %v1254 = vpack.c.b16 %v1242, %v1238
    %v1255 = vpack.c.b16 %v1243, %v1239
    %v1256 = vpack.c.b16 %v1244, %v1240
    %v1257 = vpack.c.b16 %v1245, %v1241
    %v1258 = vpack.c.b16 %v1250, %v1246
    %v1259 = vpack.c.b16 %v1251, %v1247
    %v1260 = vpack.c.b16 %v1252, %v1248
    %v1261 = vpack.c.b16 %v1253, %v1249
    %v1267 = vsel %vm405, %v1218, 0
    %v1270 = vsel %vm405, %v1219, 0
    %v1273 = vsel %vm405, %v1220, 0
    %v1276 = vsel %vm405, %v1221, 0
    %vm1278 = vcmask 1043456
    %vm1279 = vcmask 1044480
    %v1280 = vsel %vm1278, 4294967295, 65535
    %v1281 = vsel %vm1279, %v1280, 0
    %v1283 = vand.u32 %v1258, %v1281
    %v1286 = vand.u32 %v1259, %v1281
    %v1289 = vand.u32 %v1260, %v1281
    %v1292 = vand.u32 %v1261, %v1281
    %1294 = vmatpush.bf16.msra.mxu0 0
    %1295 = vmatpush.bf16.msra.mxu0 0
    %1296 = vmatpush.bf16.msra.mxu0 0
    %1297 = vmatpush.bf16.msra.mxu0 0
    %1298 = vmatpush.bf16.msra.mxu0 0
    %1299 = vmatpush.bf16.msra.mxu0 0
    %1300 = vmatpush.bf16.msra.mxu0 %v1283
    %1301 = vmatpush.bf16.msra.mxu0 %v1254
    %1302 = vmatmul.bf16.gmra.mxu0 %v1267
    %v1303 = vpop.f32.mrf.mxu0
    %v1304 = vadd.f32 0.0, %v1303
    %v1305 = vpop.f32.mrf.mxu0
    %v1306 = vadd.f32 0.0, %v1305
    %1307 = vmatmul.bf16.gmra.mxu0 %v1270
    %v1308 = vpop.f32.mrf.mxu0
    %v1309 = vadd.f32 0.0, %v1308
    %v1310 = vpop.f32.mrf.mxu0
    %v1311 = vadd.f32 0.0, %v1310
    %1312 = vmatmul.bf16.gmra.mxu0 %v1273
    %v1313 = vpop.f32.mrf.mxu0
    %v1314 = vadd.f32 0.0, %v1313
    %v1315 = vpop.f32.mrf.mxu0
    %v1316 = vadd.f32 0.0, %v1315
    %1317 = vmatmul.bf16.gmra.mxu0 %v1276
    %v1318 = vpop.f32.mrf.mxu0
    %v1319 = vadd.f32 0.0, %v1318
    %v1320 = vpop.f32.mrf.mxu0
    %v1321 = vadd.f32 0.0, %v1320
    %1322 = vdwg.mxu0
    %1323 = vmatpush.bf16.msra.mxu0 0
    %1324 = vmatpush.bf16.msra.mxu0 0
    %1325 = vmatpush.bf16.msra.mxu0 0
    %1326 = vmatpush.bf16.msra.mxu0 0
    %1327 = vmatpush.bf16.msra.mxu0 0
    %1328 = vmatpush.bf16.msra.mxu0 0
    %1329 = vmatpush.bf16.msra.mxu0 %v1286
    %1330 = vmatpush.bf16.msra.mxu0 %v1255
    %1331 = vmatmul.bf16.gmra.mxu0 %v1267
    %v1332 = vpop.f32.mrf.mxu0
    %v1333 = vadd.f32 0.0, %v1332
    %v1334 = vpop.f32.mrf.mxu0
    %v1335 = vadd.f32 0.0, %v1334
    %1336 = vmatmul.bf16.gmra.mxu0 %v1270
    %v1337 = vpop.f32.mrf.mxu0
    %v1338 = vadd.f32 0.0, %v1337
    %v1339 = vpop.f32.mrf.mxu0
    %v1340 = vadd.f32 0.0, %v1339
    %1341 = vmatmul.bf16.gmra.mxu0 %v1273
    %v1342 = vpop.f32.mrf.mxu0
    %v1343 = vadd.f32 0.0, %v1342
    %v1344 = vpop.f32.mrf.mxu0
    %v1345 = vadd.f32 0.0, %v1344
    %1346 = vmatmul.bf16.gmra.mxu0 %v1276
    %v1347 = vpop.f32.mrf.mxu0
    %v1348 = vadd.f32 0.0, %v1347
    %v1349 = vpop.f32.mrf.mxu0
    %v1350 = vadd.f32 0.0, %v1349
    %1351 = vdwg.mxu0
    %1352 = vmatpush.bf16.msra.mxu0 0
    %1353 = vmatpush.bf16.msra.mxu0 0
    %1354 = vmatpush.bf16.msra.mxu0 0
    %1355 = vmatpush.bf16.msra.mxu0 0
    %1356 = vmatpush.bf16.msra.mxu0 0
    %1357 = vmatpush.bf16.msra.mxu0 0
    %1358 = vmatpush.bf16.msra.mxu0 %v1289
    %1359 = vmatpush.bf16.msra.mxu0 %v1256
    %1360 = vmatmul.bf16.gmra.mxu0 %v1267
    %v1361 = vpop.f32.mrf.mxu0
    %v1362 = vadd.f32 0.0, %v1361
    %v1363 = vpop.f32.mrf.mxu0
    %v1364 = vadd.f32 0.0, %v1363
    %1365 = vmatmul.bf16.gmra.mxu0 %v1270
    %v1366 = vpop.f32.mrf.mxu0
    %v1367 = vadd.f32 0.0, %v1366
    %v1368 = vpop.f32.mrf.mxu0
    %v1369 = vadd.f32 0.0, %v1368
    %1370 = vmatmul.bf16.gmra.mxu0 %v1273
    %v1371 = vpop.f32.mrf.mxu0
    %v1372 = vadd.f32 0.0, %v1371
    %v1373 = vpop.f32.mrf.mxu0
    %v1374 = vadd.f32 0.0, %v1373
    %1375 = vmatmul.bf16.gmra.mxu0 %v1276
    %v1376 = vpop.f32.mrf.mxu0
    %v1377 = vadd.f32 0.0, %v1376
    %v1378 = vpop.f32.mrf.mxu0
    %v1379 = vadd.f32 0.0, %v1378
    %1380 = vdwg.mxu0
    %1381 = vmatpush.bf16.msra.mxu0 0
    %1382 = vmatpush.bf16.msra.mxu0 0
    %1383 = vmatpush.bf16.msra.mxu0 0
    %1384 = vmatpush.bf16.msra.mxu0 0
    %1385 = vmatpush.bf16.msra.mxu0 0
    %1386 = vmatpush.bf16.msra.mxu0 0
    %1387 = vmatpush.bf16.msra.mxu0 %v1292
    %1388 = vmatpush.bf16.msra.mxu0 %v1257
    %1389 = vmatmul.bf16.gmra.mxu0 %v1267
    %v1390 = vpop.f32.mrf.mxu0
    %v1391 = vadd.f32 0.0, %v1390
    %v1392 = vpop.f32.mrf.mxu0
    %v1393 = vadd.f32 0.0, %v1392
    %1394 = vmatmul.bf16.gmra.mxu0 %v1270
    %v1395 = vpop.f32.mrf.mxu0
    %v1396 = vadd.f32 0.0, %v1395
    %v1397 = vpop.f32.mrf.mxu0
    %v1398 = vadd.f32 0.0, %v1397
    %1399 = vmatmul.bf16.gmra.mxu0 %v1273
    %v1400 = vpop.f32.mrf.mxu0
    %v1401 = vadd.f32 0.0, %v1400
    %v1402 = vpop.f32.mrf.mxu0
    %v1403 = vadd.f32 0.0, %v1402
    %1404 = vmatmul.bf16.gmra.mxu0 %v1276
    %v1405 = vpop.f32.mrf.mxu0
    %v1406 = vadd.f32 0.0, %v1405
    %v1407 = vpop.f32.mrf.mxu0
    %v1408 = vadd.f32 0.0, %v1407
    %1409 = vdwg.mxu0
    %v1410 = vmul.f32 %v28, %v1304
    %v1411 = vmul.f32 %v29, %v1333
    %v1412 = vmul.f32 %v30, %v1362
    %v1413 = vmul.f32 %v31, %v1391
    %v1414 = vmul.f32 %v32, %v1306
    %v1415 = vmul.f32 %v33, %v1335
    %v1416 = vmul.f32 %v34, %v1364
    %v1417 = vmul.f32 %v35, %v1393
    %v1418 = vmul.f32 %v36, %v1309
    %v1419 = vmul.f32 %v37, %v1338
    %v1420 = vmul.f32 %v38, %v1367
    %v1421 = vmul.f32 %v39, %v1396
    %v1422 = vmul.f32 %v40, %v1311
    %v1423 = vmul.f32 %v41, %v1340
    %v1424 = vmul.f32 %v42, %v1369
    %v1425 = vmul.f32 %v43, %v1398
    %v1426 = vmul.f32 %v44, %v1314
    %v1427 = vmul.f32 %v45, %v1343
    %v1428 = vmul.f32 %v46, %v1372
    %v1429 = vmul.f32 %v47, %v1401
    %v1430 = vmul.f32 %v48, %v1316
    %v1431 = vmul.f32 %v49, %v1345
    %v1432 = vmul.f32 %v50, %v1374
    %v1433 = vmul.f32 %v51, %v1403
    %v1434 = vmul.f32 %v52, %v1319
    %v1435 = vmul.f32 %v53, %v1348
    %v1436 = vmul.f32 %v54, %v1377
    %v1437 = vmul.f32 %v55, %v1406
    %v1438 = vmul.f32 %v56, %v1321
    %v1439 = vmul.f32 %v57, %v1350
    %v1440 = vmul.f32 %v58, %v1379
    %v1441 = vmul.f32 %v59, %v1408
    %1442 = vst [vmem:[#allocation2] sm:$0xff] %v1410
    %1443 = vst [vmem:[#allocation2 + $0x8] sm:$0xff] %v1411
    %1444 = vst [vmem:[#allocation2 + $0x10] sm:$0xff] %v1412
    %1445 = vst.msk [vmem:[#allocation2 + $0x18] sm:$0xff] %vm276, %v1413
    %1446 = vst [vmem:[#allocation2 + $0x20] sm:$0xff] %v1414
    %1447 = vst [vmem:[#allocation2 + $0x28] sm:$0xff] %v1415
    %1448 = vst [vmem:[#allocation2 + $0x30] sm:$0xff] %v1416
    %1449 = vst.msk [vmem:[#allocation2 + $0x38] sm:$0xff] %vm276, %v1417
    %1450 = vst [vmem:[#allocation2 + $0x40] sm:$0xff] %v1418
    %1451 = vst [vmem:[#allocation2 + $0x48] sm:$0xff] %v1419
    %1452 = vst [vmem:[#allocation2 + $0x50] sm:$0xff] %v1420
    %1453 = vst.msk [vmem:[#allocation2 + $0x58] sm:$0xff] %vm276, %v1421
    %1454 = vst [vmem:[#allocation2 + $0x60] sm:$0xff] %v1422
    %1455 = vst [vmem:[#allocation2 + $0x68] sm:$0xff] %v1423
    %1456 = vst [vmem:[#allocation2 + $0x70] sm:$0xff] %v1424
    %1457 = vst.msk [vmem:[#allocation2 + $0x78] sm:$0xff] %vm276, %v1425
    %1458 = vst [vmem:[#allocation2 + $0x80] sm:$0xff] %v1426
    %1459 = vst [vmem:[#allocation2 + $0x88] sm:$0xff] %v1427
    %1460 = vst [vmem:[#allocation2 + $0x90] sm:$0xff] %v1428
    %1461 = vst.msk [vmem:[#allocation2 + $0x98] sm:$0xff] %vm276, %v1429
    %1462 = vst [vmem:[#allocation2 + $0xa0] sm:$0xff] %v1430
    %1463 = vst [vmem:[#allocation2 + $0xa8] sm:$0xff] %v1431
    %1464 = vst [vmem:[#allocation2 + $0xb0] sm:$0xff] %v1432
    %1465 = vst.msk [vmem:[#allocation2 + $0xb8] sm:$0xff] %vm276, %v1433
    %1466 = vst [vmem:[#allocation2 + $0xc0] sm:$0xff] %v1434
    %1467 = vst [vmem:[#allocation2 + $0xc8] sm:$0xff] %v1435
    %1468 = vst [vmem:[#allocation2 + $0xd0] sm:$0xff] %v1436
    %1469 = vst.msk [vmem:[#allocation2 + $0xd8] sm:$0xff] %vm276, %v1437
    %1470 = vst [vmem:[#allocation2 + $0xe0] sm:$0xff] %v1438
    %1471 = vst [vmem:[#allocation2 + $0xe8] sm:$0xff] %v1439
    %1472 = vst [vmem:[#allocation2 + $0xf0] sm:$0xff] %v1440
    %1473 = vst.msk [vmem:[#allocation2 + $0xf8] sm:$0xff] %vm276, %v1441
    // Predicated region
    $region30: #{tpu_custom_call.1} parent=1 // pred_check
      _
    $region31: #{tpu_custom_call.1} parent=1 // pred_check_branch
      %1475 = sbr.rel (0) target = $region33
    $region32: #{tpu_custom_call.1} parent=1 // pred_region
      %1477 = vsyncadd [#allocation3], 0
      %s1478 = sshll.u32 [#allocation2], 4
      %s1479 = int_to_ptr.vmem [resolvable:$true] %s1478
      %s1480 = sshll.u32 %s7, 4
      %s1481 = int_to_ptr.hbm [resolvable:$true] %s1480
      %1486 = dma.vmem_to_hbm [thread:$0]  %s1479, 4096, %s1481, [#allocation3], 512, 512, 32
    $region33: #{tpu_custom_call.1} parent=1 // pred_fallthru
      _
    // Predicated region
    $region34: #{tpu_custom_call.1} parent=1 // pred_check
      _
    $region35: #{tpu_custom_call.1} parent=1 // pred_check_branch
      %1488 = sbr.rel (0) target = $region37
    $region36: #{tpu_custom_call.1} parent=1 // pred_region
      %1490 = dma.done [#allocation3], 4096
    $region37: #{tpu_custom_call.1} parent=1 // pred_fallthru
      _
    %1491 = vsyncpa [#allocation3], 1

</llo_original>
